<compile_context>
chip_gen: v6e
topology: v6e:2x2x1
jax: 0.10.0
libtpu: 0.0.40
codegen_flags: <defaults>
</compile_context>

<pallas_src>
import functools
import math

import jax
import jax.numpy as jnp
from jax.experimental import pallas as pl
from jax.experimental.pallas import tpu as pltpu


def _round_up(v, m):
    return (v + m - 1) // m * m


# ----------------------------------------------------------------------------
# Kernel 1: input_proj == matmul (1x1 conv / im2col'd 3x3 conv) + GroupNorm
# Grid: (N images, 2 phases, n_ptiles spatial tiles).  Phase 0 accumulates
# per-channel sum / sum-of-squares into VMEM scratch across P tiles of one
# image; phase 1 recomputes the projection per tile and normalizes with the
# finalized per-group statistics.  Matmuls on MXU (bf16 operands, f32 acc),
# stats + normalize on VPU, group broadcast as one tiny dot against a constant
# 0/1 membership matrix (hoisted to an input, bf16).
# ----------------------------------------------------------------------------
def _proj_gn_kernel(x_ref, w_ref, b_ref, g_ref, be_ref, mem_ref, o_ref,
                    s1_ref, s2_ref, mu_ref, sc_ref, *,
                    n_ptiles, tile_p, p_real, cnt, eps):
    ph = pl.program_id(1)                     # 0: statistics pass, 1: normalize pass
    p = pl.program_id(2)                      # spatial tile index within the image
    _, tp, Cp = x_ref.shape
    Dp = w_ref.shape[1]

    # projection for this spatial tile: x @ w + b (needed in both phases).
    x = x_ref[...].reshape(tp, Cp)                                    # bf16
    y = jnp.dot(x, w_ref[...], preferred_element_type=jnp.float32) + b_ref[...]

    @pl.when((ph == 0) & (p == 0))
    def _():
        s1_ref[...] = jnp.zeros_like(s1_ref)
        s2_ref[...] = jnp.zeros_like(s2_ref)

    @pl.when(ph == 0)
    def _():
        # rows beyond the real spatial extent are zero-padded in the wrapper;
        # mask them so they do not pollute the statistics (cnt counts real rows).
        row = jax.lax.broadcasted_iota(jnp.int32, (tp, 1), 0) + p * tile_p
        valid = (row < p_real).astype(jnp.float32)
        yv = y * valid
        s1_ref[...] += jnp.sum(yv, axis=0, keepdims=True)
        s2_ref[...] += jnp.sum(yv * y, axis=0, keepdims=True)

    @pl.when((ph == 1) & (p == 0))
    def _():
        # one batched (1,Dp)@(Dp,Dp) dot broadcasts per-channel sums to per-group
        # sums.  NOTE: padded channels live in singleton groups and rely on
        # w/b/gamma/beta padding being exactly zero (cnt is "wrong" for them but
        # harmless because those channels are exactly zero) -- do not change the
        # padding values.
        mem = mem_ref[...].astype(jnp.float32)
        s1g = jnp.dot(s1_ref[...], mem, preferred_element_type=jnp.float32)
        s2g = jnp.dot(s2_ref[...], mem, preferred_element_type=jnp.float32)
        mu = s1g * (1.0 / cnt)
        # uncentered variance in f32; GroupNorm-scale activations -> no
        # cancellation issue, and it enables single-pass stats accumulation.
        var = jnp.maximum(s2g * (1.0 / cnt) - mu * mu, 0.0)
        mu_ref[...] = mu
        sc_ref[...] = jax.lax.rsqrt(var + eps) * g_ref[...]

    @pl.when(ph == 1)
    def _():
        out = (y - mu_ref[...]) * sc_ref[...] + be_ref[...]
        o_ref[...] = out.reshape(o_ref.shape).astype(o_ref.dtype)


def matmul_groupnorm(x_npc, w, b, gamma, beta, *, num_groups=32, eps=1e-5,
                     tile_p_target=512):
    """x_npc: (N, P, Cin); w: (Cin, D). Returns (N, P, D) float32."""
    N, P, Cin = x_npc.shape
    D = w.shape[1]
    assert D % num_groups == 0, "GroupNorm requires D % num_groups == 0"
    gs = D // num_groups

    Cp = _round_up(Cin, 128)             # lane-dense K dim
    Dp = _round_up(D, 128)               # lane-dense N / output dim
    P8 = _round_up(P, 8)                 # sublane-aligned spatial dim
    tile_p = P8 if P8 <= tile_p_target else tile_p_target
    Pp = _round_up(P8, tile_p)
    n_ptiles = Pp // tile_p

    # bf16 activations / weights fed to the kernel; scale/shift stay f32.
    xp = jnp.pad(x_npc, ((0, 0), (0, Pp - P), (0, Cp - Cin))).astype(jnp.bfloat16)
    wp = jnp.pad(w, ((0, Cp - Cin), (0, Dp - D))).astype(jnp.bfloat16)
    bp = jnp.pad(b, (0, Dp - D)).reshape(1, Dp).astype(jnp.float32)
    gp = jnp.pad(gamma, (0, Dp - D)).reshape(1, Dp).astype(jnp.float32)
    bep = jnp.pad(beta, (0, Dp - D)).reshape(1, Dp).astype(jnp.float32)

    # group membership matrix (constant, hoisted out of the kernel).  Padded
    # channels get their own singleton group so they stay exactly zero and do
    # not pollute real-group statistics.  0/1 are exact in bf16.
    ch = jnp.arange(Dp)
    grp = jnp.where(ch < D, ch // gs, -1 - ch)
    mem = (grp[:, None] == grp[None, :]).astype(jnp.bfloat16)

    kern = functools.partial(_proj_gn_kernel, n_ptiles=n_ptiles, tile_p=tile_p,
                             p_real=P, cnt=float(P * gs), eps=eps)

    # explicit scoped-VMEM budget: double-buffered streamed blocks + resident
    # weights/stats + f32 projection intermediate, with headroom, capped below
    # v7x's 64 MiB physical VMEM.
    x_blk = tile_p * Cp * 2
    o_blk = tile_p * Dp * 4
    resident = Cp * Dp * 2 + Dp * Dp * 2 + 3 * Dp * 4 + 4 * Dp * 4
    y_tmp = tile_p * Dp * 4
    need = 2 * (x_blk + o_blk) + resident + 2 * y_tmp + (4 << 20)
    vmem_bytes = int(min(max(need, 8 << 20), 48 << 20))

    out = pl.pallas_call(
        kern,
        out_shape=jax.ShapeDtypeStruct((N, Pp, Dp), jnp.float32),
        grid_spec=pltpu.PrefetchScalarGridSpec(
            num_scalar_prefetch=0,
            grid=(N, 2, n_ptiles),
            in_specs=[
                pl.BlockSpec((1, tile_p, Cp), lambda n, ph, p: (n, p, 0)),
                pl.BlockSpec((Cp, Dp), lambda n, ph, p: (0, 0)),
                pl.BlockSpec((1, Dp), lambda n, ph, p: (0, 0)),
                pl.BlockSpec((1, Dp), lambda n, ph, p: (0, 0)),
                pl.BlockSpec((1, Dp), lambda n, ph, p: (0, 0)),
                pl.BlockSpec((Dp, Dp), lambda n, ph, p: (0, 0)),
            ],
            # phase 0 never writes; all phase-0 steps pin output block 0, which
            # is then fully overwritten at the first phase-1 step (so each
            # output block is visited in one consecutive run and written before
            # its writeback).
            out_specs=pl.BlockSpec((1, tile_p, Dp), lambda n, ph, p: (n, p * ph, 0)),
            scratch_shapes=[pltpu.VMEM((1, Dp), jnp.float32),   # s1 (per-channel sum)
                            pltpu.VMEM((1, Dp), jnp.float32),   # s2 (per-channel sum of squares)
                            pltpu.VMEM((1, Dp), jnp.float32),   # mean (broadcast to channels)
                            pltpu.VMEM((1, Dp), jnp.float32)],  # rsqrt(var+eps)*gamma
        ),
        compiler_params=pltpu.CompilerParams(
            dimension_semantics=("parallel", "arbitrary", "arbitrary"),
            vmem_limit_bytes=vmem_bytes),
    )(xp, wp, bp, gp, bep, mem)
    return out[:, :P, :D]                 # unpad (wrapper-side layout plumbing)


def conv1x1_groupnorm(x_nchw, w, b, gamma, beta, *, tile_p_target=512):
    N, Cin, H, W = x_nchw.shape
    D = w.shape[1]
    x = jnp.transpose(x_nchw, (0, 2, 3, 1)).reshape(N, H * W, Cin)
    y = matmul_groupnorm(x, w, b, gamma, beta, tile_p_target=tile_p_target)
    return jnp.transpose(y.reshape(N, H, W, D), (0, 3, 1, 2))


def _im2col_3x3_s2(x_nchw):
    """3x3 / stride-2 / pad-1 patches (glue: pad + strided slices only)."""
    # TODO(synk): fuse this gather into the proj kernel (accumulate 9 shifted
    # (P,Cin)@(Cin,D) taps in VMEM) to avoid the 9xCin im2col HBM round trip at
    # real scale; kept as bf16 glue here.
    N, Cin, H, W = x_nchw.shape
    Ho = (H - 1) // 2 + 1
    Wo = (W - 1) // 2 + 1
    x = jnp.transpose(x_nchw, (0, 2, 3, 1))
    xp = jnp.pad(x, ((0, 0), (1, 1), (1, 1), (0, 0)))
    cols = []
    for kh in range(3):
        for kw in range(3):
            cols.append(xp[:, kh:kh + 2 * Ho:2, kw:kw + 2 * Wo:2, :])
    col = jnp.concatenate(cols, axis=-1)                               # (N, Ho, Wo, 9*Cin)
    return col.reshape(N, Ho * Wo, 9 * Cin), Ho, Wo


def conv3x3s2_groupnorm(x_nchw, w_khkwcind, b, gamma, beta, *, tile_p_target=512):
    N = x_nchw.shape[0]
    D = w_khkwcind.shape[-1]
    col, Ho, Wo = _im2col_3x3_s2(x_nchw.astype(jnp.bfloat16))          # bf16 intermediate
    wflat = w_khkwcind.reshape(-1, D)                                  # (9*Cin, D)
    y = matmul_groupnorm(col, wflat, b, gamma, beta, tile_p_target=tile_p_target)
    return jnp.transpose(y.reshape(N, Ho, Wo, D), (0, 3, 1, 2))


# ----------------------------------------------------------------------------
# Kernel 2: prediction heads.  Grid = one (decoder layer, video) row-block per
# step (class_embed / bbox_embed are shared across layers: with_box_refine
# False, so weights are resident).  class Linear + 3-layer bbox MLP on MXU
# (bf16 operands / f32 acc); inverse_sigmoid(reference) is computed from the
# natural (T,Q,2) reference tensor and added to lanes 0/1 via a lane mask;
# mean over frames + sigmoid on VPU+EUP.  Outputs are lane-dense 128-wide
# slabs, unpadded in the wrapper.
# ----------------------------------------------------------------------------
def _head_kernel(hs_ref, hsb_ref, ref_ref, wc_ref, bc_ref,
                 w1_ref, b1_ref, w2_ref, b2_ref, w3_ref, b3_ref,
                 logits_ref, boxes_ref):
    _, Q, Dp = hs_ref.shape
    T = hsb_ref.shape[1]
    Cp = wc_ref.shape[1]
    rows = T * Q

    # class_embed
    hs2 = hs_ref[...].reshape(Q, Dp)                                   # bf16
    logits = jnp.dot(hs2, wc_ref[...],
                     preferred_element_type=jnp.float32) + bc_ref[...]
    logits_ref[...] = logits.reshape(1, Q, Cp).astype(logits_ref.dtype)

    # bbox_embed MLP (Linear-ReLU-Linear-ReLU-Linear), last layer padded to 128
    h = hsb_ref[...].reshape(rows, Dp)                                 # bf16
    h = jnp.maximum(jnp.dot(h, w1_ref[...],
                            preferred_element_type=jnp.float32) + b1_ref[...], 0.0)
    h = jnp.maximum(jnp.dot(h.astype(jnp.bfloat16), w2_ref[...],
                            preferred_element_type=jnp.float32) + b2_ref[...], 0.0)
    tmp = jnp.dot(h.astype(jnp.bfloat16), w3_ref[...],
                  preferred_element_type=jnp.float32) + b3_ref[...]    # (rows, 128)

    # tmp[..., :2] += inverse_sigmoid(reference); lanes 2..127 untouched (w3/b3
    # padding is exactly zero there, so padded lanes stay zero before sigmoid
    # and are discarded by the wrapper slice [..., :4]).
    r = jnp.clip(ref_ref[...].reshape(rows, 2), 0.0, 1.0)
    inv = jnp.log(jnp.maximum(r, 1e-5) / jnp.maximum(1.0 - r, 1e-5))   # f32
    lane = jax.lax.broadcasted_iota(jnp.int32, (rows, 128), 1)
    tmp = (tmp + jnp.where(lane == 0, inv[:, 0:1], 0.0)
               + jnp.where(lane == 1, inv[:, 1:2], 0.0))

    coord = jax.nn.sigmoid(jnp.mean(tmp.reshape(1, T, Q, 128), axis=1))  # mean over frames
    boxes_ref[...] = coord.astype(boxes_ref.dtype)


def detr_heads(hs, hs_box, refs2, params):
    """hs: (L,B,Q,D); hs_box: (L,B,T,Q,D); refs2: (L,B,T,Q,2) in sigmoid space."""
    L, B, Q, D = hs.shape
    T = hs_box.shape[2]
    C = params["class_w"].shape[1]
    Dp = _round_up(D, 128)
    Cp = _round_up(C, 128)
    Qp = _round_up(Q, 8)                 # sublane-aligned query dim (free reshapes)
    LB = L * B

    # bf16 activations / weights fed to the kernel; biases / references stay f32.
    hs_f = jnp.pad(hs.reshape(LB, Q, D),
                   ((0, 0), (0, Qp - Q), (0, Dp - D))).astype(jnp.bfloat16)
    hsb_f = jnp.pad(hs_box.reshape(LB, T, Q, D),
                    ((0, 0), (0, 0), (0, Qp - Q), (0, Dp - D))).astype(jnp.bfloat16)
    refs_f = jnp.pad(refs2.reshape(LB, T, Q, 2),
                     ((0, 0), (0, 0), (0, Qp - Q), (0, 0)),
                     constant_values=0.5).astype(jnp.float32)

    wc = jnp.pad(params["class_w"], ((0, Dp - D), (0, Cp - C))).astype(jnp.bfloat16)
    bc = jnp.pad(params["class_b"], (0, Cp - C)).reshape(1, Cp).astype(jnp.float32)
    w1 = jnp.pad(params["mlp_w1"], ((0, Dp - D), (0, Dp - D))).astype(jnp.bfloat16)
    b1 = jnp.pad(params["mlp_b1"], (0, Dp - D)).reshape(1, Dp).astype(jnp.float32)
    w2 = jnp.pad(params["mlp_w2"], ((0, Dp - D), (0, Dp - D))).astype(jnp.bfloat16)
    b2 = jnp.pad(params["mlp_b2"], (0, Dp - D)).reshape(1, Dp).astype(jnp.float32)
    w3 = jnp.pad(params["mlp_w3"], ((0, Dp - D), (0, 128 - 4))).astype(jnp.bfloat16)
    b3 = jnp.pad(params["mlp_b3"], (0, 128 - 4)).reshape(1, 128).astype(jnp.float32)

    # explicit scoped-VMEM budget (double-buffered streamed blocks + resident
    # weights + f32 MLP intermediates + headroom, capped below v7x physical).
    # TODO(synk): at real (T,Q,D) scale also move T onto an 'arbitrary' grid axis
    # and accumulate the over-frames mean into VMEM scratch with a pl.when finalize.
    b_in = Qp * Dp * 2 + T * Qp * Dp * 2 + T * Qp * 2 * 4
    b_wt = Dp * Cp * 2 + 2 * Dp * Dp * 2 + Dp * 128 * 2 + (Cp + 2 * Dp + 128) * 4
    b_out = Qp * Cp * 4 + Qp * 128 * 4
    b_tmp = 3 * T * Qp * Dp * 4
    need = 2 * (b_in + b_out) + b_wt + b_tmp + (4 << 20)
    vmem_bytes = int(min(max(need, 8 << 20), 48 << 20))

    out_shape = (jax.ShapeDtypeStruct((LB, Qp, Cp), jnp.float32),
                 jax.ShapeDtypeStruct((LB, Qp, 128), jnp.float32))
    logits_p, boxes_p = pl.pallas_call(
        _head_kernel,
        out_shape=out_shape,
        grid_spec=pltpu.PrefetchScalarGridSpec(
            num_scalar_prefetch=0,
            grid=(LB,),
            in_specs=[
                pl.BlockSpec((1, Qp, Dp), lambda g: (g, 0, 0)),
                pl.BlockSpec((1, T, Qp, Dp), lambda g: (g, 0, 0, 0)),
                pl.BlockSpec((1, T, Qp, 2), lambda g: (g, 0, 0, 0)),
                pl.BlockSpec((Dp, Cp), lambda g: (0, 0)),
                pl.BlockSpec((1, Cp), lambda g: (0, 0)),
                pl.BlockSpec((Dp, Dp), lambda g: (0, 0)),
                pl.BlockSpec((1, Dp), lambda g: (0, 0)),
                pl.BlockSpec((Dp, Dp), lambda g: (0, 0)),
                pl.BlockSpec((1, Dp), lambda g: (0, 0)),
                pl.BlockSpec((Dp, 128), lambda g: (0, 0)),
                pl.BlockSpec((1, 128), lambda g: (0, 0)),
            ],
            out_specs=[
                pl.BlockSpec((1, Qp, Cp), lambda g: (g, 0, 0)),
                pl.BlockSpec((1, Qp, 128), lambda g: (g, 0, 0)),
            ],
        ),
        compiler_params=pltpu.CompilerParams(
            dimension_semantics=("parallel",),
            vmem_limit_bytes=vmem_bytes),
    )(hs_f, hsb_f, refs_f, wc, bc, w1, b1, w2, b2, w3, b3)

    logits = logits_p[:, :Q, :C].reshape(L, B, Q, C)
    boxes = boxes_p[:, :Q, :4].reshape(L, B, Q, 4)
    return logits, boxes


# ----------------------------------------------------------------------------
# Deterministic parameter init (mirrors the module's __init__ constants).
# ----------------------------------------------------------------------------
def init_params(key, *, D, C, lvl_channels):
    keys = jax.random.split(key, 16)
    k = 1.0 / math.sqrt(D)
    params = {}
    # class_embed (shared across decoder layers: with_box_refine=False)
    params["class_w"] = jax.random.uniform(keys[0], (D, C), jnp.float32, -k, k)
    bias_value = -math.log((1 - 0.01) / 0.01)
    params["class_b"] = jnp.full((C,), bias_value, jnp.float32)
    # bbox_embed = MLP(D, D, 4, 3); last layer weight=0, bias=[0,0,-2,-2]
    params["mlp_w1"] = jax.random.uniform(keys[1], (D, D), jnp.float32, -k, k)
    params["mlp_b1"] = jax.random.uniform(keys[2], (D,), jnp.float32, -k, k)
    params["mlp_w2"] = jax.random.uniform(keys[3], (D, D), jnp.float32, -k, k)
    params["mlp_b2"] = jax.random.uniform(keys[4], (D,), jnp.float32, -k, k)
    params["mlp_w3"] = jnp.zeros((D, 4), jnp.float32)
    params["mlp_b3"] = jnp.array([0.0, 0.0, -2.0, -2.0], jnp.float32)
    # input_proj: 1x1 convs (xavier_uniform, bias=0) + GroupNorm(32, D)
    proj = []
    for i, cin in enumerate(lvl_channels):
        bound = math.sqrt(6.0 / (cin + D))
        proj.append(dict(
            w=jax.random.uniform(keys[5 + i], (cin, D), jnp.float32, -bound, bound),
            b=jnp.zeros((D,), jnp.float32),
            gamma=jnp.ones((D,), jnp.float32),
            beta=jnp.zeros((D,), jnp.float32)))
    # extra feature level: Conv2d(cin, D, 3, stride=2, padding=1) + GroupNorm
    cin = lvl_channels[-1]
    bound = math.sqrt(6.0 / (cin * 9 + D * 9))
    proj.append(dict(
        w=jax.random.uniform(keys[10], (3, 3, cin, D), jnp.float32, -bound, bound),
        b=jnp.zeros((D,), jnp.float32),
        gamma=jnp.ones((D,), jnp.float32),
        beta=jnp.zeros((D,), jnp.float32)))
    params["input_proj"] = proj
    return params


# ----------------------------------------------------------------------------
# Pure-JAX references for correctness checks.
# ----------------------------------------------------------------------------
def _heads_reference(hs, hs_box, refs2, params):
    outs_c, outs_b = [], []
    for lvl in range(hs.shape[0]):
        oc = hs[lvl] @ params["class_w"] + params["class_b"]
        h = jax.nn.relu(hs_box[lvl] @ params["mlp_w1"] + params["mlp_b1"])
        h = jax.nn.relu(h @ params["mlp_w2"] + params["mlp_b2"])
        tmp = h @ params["mlp_w3"] + params["mlp_b3"]
        r = jnp.clip(refs2[lvl], 0.0, 1.0)
        inv = jnp.log(jnp.maximum(r, 1e-5) / jnp.maximum(1.0 - r, 1e-5))
        tmp = tmp.at[..., :2].add(inv)
        outs_b.append(jax.nn.sigmoid(tmp.mean(axis=1)))
        outs_c.append(oc)
    return jnp.stack(outs_c), jnp.stack(outs_b)


def _gn_nchw_reference(y, gamma, beta, num_groups=32, eps=1e-5):
    N, D, H, W = y.shape
    yg = y.reshape(N, num_groups, D // num_groups, H, W)
    mean = yg.mean(axis=(2, 3, 4), keepdims=True)
    var = yg.var(axis=(2, 3, 4), keepdims=True)
    yn = ((yg - mean) / jnp.sqrt(var + eps)).reshape(N, D, H, W)
    return yn * gamma[None, :, None, None] + beta[None, :, None, None]


def _conv1x1_gn_reference(x, p):
    y = jnp.einsum("nchw,cd->ndhw", x, p["w"]) + p["b"][None, :, None, None]
    return _gn_nchw_reference(y, p["gamma"], p["beta"])


def _conv3x3s2_gn_reference(x, p):
    w = jnp.transpose(p["w"], (3, 2, 0, 1))                            # OIHW
    y = jax.lax.conv_general_dilated(
        x, w, window_strides=(2, 2), padding=((1, 1), (1, 1)),
        dimension_numbers=("NCHW", "OIHW", "NCHW"))
    y = y + p["b"][None, :, None, None]
    return _gn_nchw_reference(y, p["gamma"], p["beta"])


if __name__ == "__main__":
    # small-but-consistent shapes
    B, T = 2, 2            # videos, num_frames
    D = 32                 # hidden_dim (transformer.d_model)
    C = 8                  # num_classes
    Q = 8                  # num_queries
    L = 3                  # decoder layers -> num_pred
    lvl_channels = [16, 24, 40]
    lvl_sizes = [(16, 16), (8, 8), (4, 4)]
    N = B * T              # images fed to input_proj (NCHW)

    root = jax.random.PRNGKey(0)
    pkey, dkey = jax.random.split(root)
    params = init_params(pkey, D=D, C=C, lvl_channels=lvl_channels)
    dkeys = jax.random.split(dkey, 8)

    # TODO(synk): backbone is an external module (backbone.py); deterministic
    # stand-in multi-scale NCHW feature maps are generated here instead.
    feats = [jax.random.normal(dkeys[i], (N, c, h, w), jnp.float32)
             for i, (c, (h, w)) in enumerate(zip(lvl_channels, lvl_sizes))]

    # input_proj (Pallas kernel: matmul + P-tiled GroupNorm), including the extra
    # 3x3/stride-2 level (num_feature_levels = len(lvl_channels) + 1).
    # tile_p_target=128 is small on purpose so the demo exercises the multi-tile
    # stats-accumulation path (P=256 on level 0 -> 2 spatial tiles); use a larger
    # target (~512) at real feature-map sizes.
    srcs = []
    for l in range(len(lvl_channels)):
        p = params["input_proj"][l]
        srcs.append(conv1x1_groupnorm(feats[l], p["w"], p["b"], p["gamma"], p["beta"],
                                      tile_p_target=128))
    p = params["input_proj"][-1]
    srcs.append(conv3x3s2_groupnorm(feats[-1], p["w"], p["b"], p["gamma"], p["beta"],
                                    tile_p_target=128))

    # TODO(synk): the deformable transformer is an external module; generate
    # deterministic decoder states / reference points that depend on the
    # projected srcs so the pipeline stays connected.
    query_embed = jax.random.normal(dkeys[3], (Q, 2 * D), jnp.float32)
    tgt = query_embed[:, D:]
    pooled = jnp.stack([s.mean(axis=(2, 3)) for s in srcs], 0).mean(0)  # (N, D)
    pooled = pooled.reshape(B, T, D)
    hs = jnp.tanh(tgt[None, None] + pooled.mean(axis=1)[None, :, None, :]
                  + 0.1 * jax.random.normal(dkeys[4], (L, 1, 1, D), jnp.float32))
    hs_box = jnp.tanh(tgt[None, None, None] + pooled[None, :, :, None, :]
                      + 0.1 * jax.random.normal(dkeys[5], (L, 1, 1, 1, D), jnp.float32))
    init_reference = jax.nn.sigmoid(
        jax.random.normal(dkeys[6], (B, T, Q, 2), jnp.float32))
    inter_references = jax.nn.sigmoid(
        jax.random.normal(dkeys[7], (L - 1, B, T, Q, 2), jnp.float32))
    refs2 = jnp.concatenate([init_reference[None], inter_references], axis=0)

    # prediction heads (Pallas kernel)
    logits, boxes = detr_heads(hs, hs_box, refs2, params)
    outputs = {
        "pred_logits": logits[-1],          # [B, Q, C]
        "pred_boxes": boxes[-1],            # [B, Q, 4]
        "aux_outputs": [{"pred_logits": a, "pred_boxes": b}
                        for a, b in zip(logits[:-1], boxes[:-1])],
    }
    jax.block_until_ready(outputs["pred_logits"])
    jax.block_until_ready(outputs["pred_boxes"])

    # correctness checks vs pure-JAX references (tolerances account for bf16
    # MXU operands with f32 accumulation inside the kernels).
    ref_src0 = _conv1x1_gn_reference(feats[0], params["input_proj"][0])
    assert jnp.allclose(srcs[0], ref_src0, atol=5e-2, rtol=5e-2)
    ref_src3 = _conv3x3s2_gn_reference(feats[-1], params["input_proj"][-1])
    assert jnp.allclose(srcs[-1], ref_src3, atol=5e-2, rtol=5e-2)
    ref_logits, ref_boxes = _heads_reference(hs, hs_box, refs2, params)
    assert jnp.allclose(logits, ref_logits, atol=2e-2, rtol=2e-2)
    assert jnp.allclose(boxes, ref_boxes, atol=2e-2, rtol=2e-2)

    print("KERNEL_OK")
</pallas_src>

<mosaic_0001>
module attributes {stable_mosaic.version = 11 : i64} {
  func.func @_proj_gn_kernel(%arg0: i32, %arg1: i32, %arg2: i32, %arg3: memref<1x128x128xbf16, #tpu.memory_space<vmem>>, %arg4: memref<128x128xbf16, #tpu.memory_space<vmem>>, %arg5: memref<1x128xf32, #tpu.memory_space<vmem>>, %arg6: memref<1x128xf32, #tpu.memory_space<vmem>>, %arg7: memref<1x128xf32, #tpu.memory_space<vmem>>, %arg8: memref<128x128xbf16, #tpu.memory_space<vmem>>, %arg9: memref<1x128x128xf32, #tpu.memory_space<vmem>>, %arg10: memref<1x128xf32, #tpu.memory_space<vmem>>, %arg11: memref<1x128xf32, #tpu.memory_space<vmem>>, %arg12: memref<1x128xf32, #tpu.memory_space<vmem>>, %arg13: memref<1x128xf32, #tpu.memory_space<vmem>>) attributes {dimension_semantics = [#tpu.dimension_semantics<parallel>, #tpu.dimension_semantics<arbitrary>, #tpu.dimension_semantics<arbitrary>], iteration_bounds = array<i64: 4, 2, 2>, scalar_prefetch = 0 : i64, scratch_operands = 4 : i64, tpu.core_type = #tpu.core_type<tc>, window_params = [{transform_indices = @transform_0, window_bounds = array<i64: 1, 128, 128>}, {pipeline_mode = #tpu.pipeline_mode<synchronous>, transform_indices = @transform_1, window_bounds = array<i64: 128, 128>}, {pipeline_mode = #tpu.pipeline_mode<synchronous>, transform_indices = @transform_2, window_bounds = array<i64: 1, 128>}, {pipeline_mode = #tpu.pipeline_mode<synchronous>, transform_indices = @transform_3, window_bounds = array<i64: 1, 128>}, {pipeline_mode = #tpu.pipeline_mode<synchronous>, transform_indices = @transform_4, window_bounds = array<i64: 1, 128>}, {pipeline_mode = #tpu.pipeline_mode<synchronous>, transform_indices = @transform_5, window_bounds = array<i64: 128, 128>}, {transform_indices = @transform_6, window_bounds = array<i64: 1, 128, 128>}]} {
    %c0 = arith.constant 0 : index
    %c0_0 = arith.constant 0 : index
    %c0_1 = arith.constant 0 : index
    %0 = vector.load %arg3[%c0, %c0_0, %c0_1] : memref<1x128x128xbf16, #tpu.memory_space<vmem>>, vector<1x128x128xbf16>
    %1 = vector.shape_cast %0 : vector<1x128x128xbf16> to vector<128x128xbf16>
    %c0_2 = arith.constant 0 : index
    %c0_3 = arith.constant 0 : index
    %2 = vector.load %arg4[%c0_2, %c0_3] : memref<128x128xbf16, #tpu.memory_space<vmem>>, vector<128x128xbf16>
    %cst = arith.constant dense<0.000000e+00> : vector<128x128xf32>
    %3 = tpu.matmul %1, %2, %cst {dimension_numbers = #tpu.dot_dimension_numbers<[1], [0], [0], [1], [0, 0, 1, 1], [], []>} : vector<128x128xbf16>, vector<128x128xbf16>, vector<128x128xf32> -> vector<128x128xf32>
    %c0_4 = arith.constant 0 : index
    %c0_5 = arith.constant 0 : index
    %4 = vector.load %arg5[%c0_4, %c0_5] : memref<1x128xf32, #tpu.memory_space<vmem>>, vector<1x128xf32>
    %5 = vector.broadcast %4 : vector<1x128xf32> to vector<128x128xf32>
    %6 = arith.addf %3, %5 : vector<128x128xf32>
    %c0_i32 = arith.constant 0 : i32
    %7 = arith.cmpi eq, %arg1, %c0_i32 : i32
    %c0_i32_6 = arith.constant 0 : i32
    %8 = arith.cmpi eq, %arg2, %c0_i32_6 : i32
    %9 = arith.andi %7, %8 : i1
    %10 = arith.extui %9 : i1 to i32
    %c0_i32_7 = arith.constant 0 : i32
    %11 = arith.cmpi ne, %10, %c0_i32_7 : i32
    scf.if %11 {
      %cst_14 = arith.constant 0.000000e+00 : f32
      %23 = vector.broadcast %cst_14 : f32 to vector<1x128xf32>
      %c0_15 = arith.constant 0 : index
      %c0_16 = arith.constant 0 : index
      %24 = vector.load %arg10[%c0_15, %c0_16] : memref<1x128xf32, #tpu.memory_space<vmem>>, vector<1x128xf32>
      tpu.vector_store %arg10[%c0_15, %c0_16], %23 {strides = array<i32>} : memref<1x128xf32, #tpu.memory_space<vmem>>, vector<1x128xf32>,
      %cst_17 = arith.constant 0.000000e+00 : f32
      %25 = vector.broadcast %cst_17 : f32 to vector<1x128xf32>
      %c0_18 = arith.constant 0 : index
      %c0_19 = arith.constant 0 : index
      %26 = vector.load %arg11[%c0_18, %c0_19] : memref<1x128xf32, #tpu.memory_space<vmem>>, vector<1x128xf32>
      tpu.vector_store %arg11[%c0_18, %c0_19], %25 {strides = array<i32>} : memref<1x128xf32, #tpu.memory_space<vmem>>, vector<1x128xf32>,
    } else {
    }
    %c0_i32_8 = arith.constant 0 : i32
    %12 = arith.cmpi eq, %arg1, %c0_i32_8 : i32
    %13 = arith.extui %12 : i1 to i32
    %c0_i32_9 = arith.constant 0 : i32
    %14 = arith.cmpi ne, %13, %c0_i32_9 : i32
    scf.if %14 {
      %23 = tpu.iota {dimensions = array<i32: 0>} : vector<128x1xi32>
      %c128_i32 = arith.constant 128 : i32
      %24 = arith.muli %arg2, %c128_i32 : i32
      %25 = vector.broadcast %24 : i32 to vector<128x1xi32>
      %26 = arith.addi %23, %25 : vector<128x1xi32>
      %c256_i32 = arith.constant 256 : i32
      %27 = vector.broadcast %c256_i32 : i32 to vector<128x1xi32>
      %28 = arith.cmpi slt, %26, %27 : vector<128x1xi32>
      %29 = arith.extui %28 : vector<128x1xi1> to vector<128x1xi32>
      %30 = arith.sitofp %29 : vector<128x1xi32> to vector<128x1xf32>
      %31 = vector.broadcast %30 : vector<128x1xf32> to vector<128x128xf32>
      %32 = arith.mulf %6, %31 : vector<128x128xf32>
      %c0_14 = arith.constant 0 : index
      %c0_15 = arith.constant 0 : index
      %33 = vector.load %arg10[%c0_14, %c0_15] : memref<1x128xf32, #tpu.memory_space<vmem>>, vector<1x128xf32>
      %cst_16 = arith.constant dense<0.000000e+00> : vector<128xf32>
      %34 = vector.multi_reduction <add>, %32, %cst_16 [0] : vector<128x128xf32> to vector<128xf32>
      %35 = vector.shape_cast %34 : vector<128xf32> to vector<1x128xf32>
      %36 = arith.addf %33, %35 : vector<1x128xf32>
      %c0_17 = arith.constant 0 : index
      %c0_18 = arith.constant 0 : index
      %37 = vector.load %arg10[%c0_17, %c0_18] : memref<1x128xf32, #tpu.memory_space<vmem>>, vector<1x128xf32>
      tpu.vector_store %arg10[%c0_17, %c0_18], %36 {strides = array<i32>} : memref<1x128xf32, #tpu.memory_space<vmem>>, vector<1x128xf32>,
      %c0_19 = arith.constant 0 : index
      %c0_20 = arith.constant 0 : index
      %38 = vector.load %arg11[%c0_19, %c0_20] : memref<1x128xf32, #tpu.memory_space<vmem>>, vector<1x128xf32>
      %39 = arith.mulf %32, %6 : vector<128x128xf32>
      %cst_21 = arith.constant dense<0.000000e+00> : vector<128xf32>
      %40 = vector.multi_reduction <add>, %39, %cst_21 [0] : vector<128x128xf32> to vector<128xf32>
      %41 = vector.shape_cast %40 : vector<128xf32> to vector<1x128xf32>
      %42 = arith.addf %38, %41 : vector<1x128xf32>
      %c0_22 = arith.constant 0 : index
      %c0_23 = arith.constant 0 : index
      %43 = vector.load %arg11[%c0_22, %c0_23] : memref<1x128xf32, #tpu.memory_space<vmem>>, vector<1x128xf32>
      tpu.vector_store %arg11[%c0_22, %c0_23], %42 {strides = array<i32>} : memref<1x128xf32, #tpu.memory_space<vmem>>, vector<1x128xf32>,
    } else {
    }
    %c1_i32 = arith.constant 1 : i32
    %15 = arith.cmpi eq, %arg1, %c1_i32 : i32
    %c0_i32_10 = arith.constant 0 : i32
    %16 = arith.cmpi eq, %arg2, %c0_i32_10 : i32
    %17 = arith.andi %15, %16 : i1
    %18 = arith.extui %17 : i1 to i32
    %c0_i32_11 = arith.constant 0 : i32
    %19 = arith.cmpi ne, %18, %c0_i32_11 : i32
    scf.if %19 {
      %c0_14 = arith.constant 0 : index
      %c0_15 = arith.constant 0 : index
      %23 = vector.load %arg8[%c0_14, %c0_15] : memref<128x128xbf16, #tpu.memory_space<vmem>>, vector<128x128xbf16>
      %24 = arith.extf %23 : vector<128x128xbf16> to vector<128x128xf32>
      %c0_16 = arith.constant 0 : index
      %c0_17 = arith.constant 0 : index
      %25 = vector.load %arg10[%c0_16, %c0_17] : memref<1x128xf32, #tpu.memory_space<vmem>>, vector<1x128xf32>
      %cst_18 = arith.constant dense<0.000000e+00> : vector<1x128xf32>
      %26 = tpu.matmul %25, %24, %cst_18 {dimension_numbers = #tpu.dot_dimension_numbers<[1], [0], [0], [1], [0, 0, 1, 1], [], []>} : vector<1x128xf32>, vector<128x128xf32>, vector<1x128xf32> -> vector<1x128xf32>
      %c0_19 = arith.constant 0 : index
      %c0_20 = arith.constant 0 : index
      %27 = vector.load %arg11[%c0_19, %c0_20] : memref<1x128xf32, #tpu.memory_space<vmem>>, vector<1x128xf32>
      %cst_21 = arith.constant dense<0.000000e+00> : vector<1x128xf32>
      %28 = tpu.matmul %27, %24, %cst_21 {dimension_numbers = #tpu.dot_dimension_numbers<[1], [0], [0], [1], [0, 0, 1, 1], [], []>} : vector<1x128xf32>, vector<128x128xf32>, vector<1x128xf32> -> vector<1x128xf32>
      %cst_22 = arith.constant 3.906250e-03 : f32
      %29 = vector.broadcast %cst_22 : f32 to vector<1x128xf32>
      %30 = arith.mulf %26, %29 : vector<1x128xf32>
      %cst_23 = arith.constant 3.906250e-03 : f32
      %31 = vector.broadcast %cst_23 : f32 to vector<1x128xf32>
      %32 = arith.mulf %28, %31 : vector<1x128xf32>
      %33 = arith.mulf %30, %30 : vector<1x128xf32>
      %34 = arith.subf %32, %33 : vector<1x128xf32>
      %cst_24 = arith.constant 0.000000e+00 : f32
      %35 = vector.broadcast %cst_24 : f32 to vector<1x128xf32>
      %36 = arith.maximumf %34, %35 : vector<1x128xf32>
      %c0_25 = arith.constant 0 : index
      %c0_26 = arith.constant 0 : index
      %37 = vector.load %arg12[%c0_25, %c0_26] : memref<1x128xf32, #tpu.memory_space<vmem>>, vector<1x128xf32>
      tpu.vector_store %arg12[%c0_25, %c0_26], %30 {strides = array<i32>} : memref<1x128xf32, #tpu.memory_space<vmem>>, vector<1x128xf32>,
      %cst_27 = arith.constant 9.99999974E-6 : f32
      %38 = vector.broadcast %cst_27 : f32 to vector<1x128xf32>
      %39 = arith.addf %36, %38 : vector<1x128xf32>
      %40 = math.rsqrt %39 : vector<1x128xf32>
      %c0_28 = arith.constant 0 : index
      %c0_29 = arith.constant 0 : index
      %41 = vector.load %arg6[%c0_28, %c0_29] : memref<1x128xf32, #tpu.memory_space<vmem>>, vector<1x128xf32>
      %42 = arith.mulf %40, %41 : vector<1x128xf32>
      %c0_30 = arith.constant 0 : index
      %c0_31 = arith.constant 0 : index
      %43 = vector.load %arg13[%c0_30, %c0_31] : memref<1x128xf32, #tpu.memory_space<vmem>>, vector<1x128xf32>
      tpu.vector_store %arg13[%c0_30, %c0_31], %42 {strides = array<i32>} : memref<1x128xf32, #tpu.memory_space<vmem>>, vector<1x128xf32>,
    } else {
    }
    %c1_i32_12 = arith.constant 1 : i32
    %20 = arith.cmpi eq, %arg1, %c1_i32_12 : i32
    %21 = arith.extui %20 : i1 to i32
    %c0_i32_13 = arith.constant 0 : i32
    %22 = arith.cmpi ne, %21, %c0_i32_13 : i32
    scf.if %22 {
      %c0_14 = arith.constant 0 : index
      %c0_15 = arith.constant 0 : index
      %23 = vector.load %arg12[%c0_14, %c0_15] : memref<1x128xf32, #tpu.memory_space<vmem>>, vector<1x128xf32>
      %24 = vector.broadcast %23 : vector<1x128xf32> to vector<128x128xf32>
      %25 = arith.subf %6, %24 : vector<128x128xf32>
      %c0_16 = arith.constant 0 : index
      %c0_17 = arith.constant 0 : index
      %26 = vector.load %arg13[%c0_16, %c0_17] : memref<1x128xf32, #tpu.memory_space<vmem>>, vector<1x128xf32>
      %27 = vector.broadcast %26 : vector<1x128xf32> to vector<128x128xf32>
      %28 = arith.mulf %25, %27 : vector<128x128xf32>
      %c0_18 = arith.constant 0 : index
      %c0_19 = arith.constant 0 : index
      %29 = vector.load %arg7[%c0_18, %c0_19] : memref<1x128xf32, #tpu.memory_space<vmem>>, vector<1x128xf32>
      %30 = vector.broadcast %29 : vector<1x128xf32> to vector<128x128xf32>
      %31 = arith.addf %28, %30 : vector<128x128xf32>
      %32 = vector.shape_cast %31 : vector<128x128xf32> to vector<1x128x128xf32>
      %c0_20 = arith.constant 0 : index
      %c0_21 = arith.constant 0 : index
      %c0_22 = arith.constant 0 : index
      %33 = vector.load %arg9[%c0_20, %c0_21, %c0_22] : memref<1x128x128xf32, #tpu.memory_space<vmem>>, vector<1x128x128xf32>
      tpu.vector_store %arg9[%c0_20, %c0_21, %c0_22], %32 {strides = array<i32>} : memref<1x128x128xf32, #tpu.memory_space<vmem>>, vector<1x128x128xf32>,
    } else {
    }
    return
  }
  func.func @transform_0(%arg0: i32, %arg1: i32, %arg2: i32) -> (i32, i32, i32) {
    %c0_i32 = arith.constant 0 : i32
    %c0_i32_0 = arith.constant 0 : i32
    return %arg0, %arg2, %c0_i32 : i32, i32, i32
  }
  func.func @transform_1(%arg0: i32, %arg1: i32, %arg2: i32) -> (i32, i32) {
    %c0_i32 = arith.constant 0 : i32
    %c0_i32_0 = arith.constant 0 : i32
    %c0_i32_1 = arith.constant 0 : i32
    return %c0_i32, %c0_i32_0 : i32, i32
  }
  func.func @transform_2(%arg0: i32, %arg1: i32, %arg2: i32) -> (i32, i32) {
    %c0_i32 = arith.constant 0 : i32
    %c0_i32_0 = arith.constant 0 : i32
    %c0_i32_1 = arith.constant 0 : i32
    return %c0_i32, %c0_i32_0 : i32, i32
  }
  func.func @transform_3(%arg0: i32, %arg1: i32, %arg2: i32) -> (i32, i32) {
    %c0_i32 = arith.constant 0 : i32
    %c0_i32_0 = arith.constant 0 : i32
    %c0_i32_1 = arith.constant 0 : i32
    return %c0_i32, %c0_i32_0 : i32, i32
  }
  func.func @transform_4(%arg0: i32, %arg1: i32, %arg2: i32) -> (i32, i32) {
    %c0_i32 = arith.constant 0 : i32
    %c0_i32_0 = arith.constant 0 : i32
    %c0_i32_1 = arith.constant 0 : i32
    return %c0_i32, %c0_i32_0 : i32, i32
  }
  func.func @transform_5(%arg0: i32, %arg1: i32, %arg2: i32) -> (i32, i32) {
    %c0_i32 = arith.constant 0 : i32
    %c0_i32_0 = arith.constant 0 : i32
    %c0_i32_1 = arith.constant 0 : i32
    return %c0_i32, %c0_i32_0 : i32, i32
  }
  func.func @transform_6(%arg0: i32, %arg1: i32, %arg2: i32) -> (i32, i32, i32) {
    %0 = arith.muli %arg2, %arg1 : i32
    %c0_i32 = arith.constant 0 : i32
    %c0_i32_0 = arith.constant 0 : i32
    return %arg0, %0, %c0_i32 : i32, i32, i32
  }
}

</mosaic_0001>

<llo_original>
// kernel: tpu_custom_call.1
$region0: #{tpu_custom_call.1}
  #allocation0 [shape = 'u32[]', space=smem, size = 0x4, offset = 0x4, fixed_abs, tag = 'smem constant byte address 0x4 - core index']
  #allocation1 [shape = 'u32[144,128]{1,0:T(1,128)}', space=vmem, size = 0x12000, scoped, tag = 'internal scratch']
  #allocation2 [shape = 'f32[1,128]{1,0:T(1,128)}', space=vmem, size = 0x200, scoped, tag = 'scratch operand']
  #allocation3 [shape = 'f32[1,128]{1,0:T(1,128)}', space=vmem, size = 0x200, scoped, tag = 'scratch operand']
  #allocation4 [shape = 'f32[1,128]{1,0:T(1,128)}', space=vmem, size = 0x200, scoped, tag = 'scratch operand']
  #allocation5 [shape = 'f32[1,128]{1,0:T(1,128)}', space=vmem, size = 0x200, scoped, tag = 'scratch operand']
  %s0 = inlined_call_operand.hbm [shape: bf16[4,256,128], index: 0, kind: input, shape index: {}]
  %s1 = inlined_call_operand.hbm [shape: bf16[128,128], index: 1, kind: input, shape index: {}]
  %s2 = inlined_call_operand.vmem [shape: f32[1,128], index: 2, kind: input, shape index: {}]
  %s3 = inlined_call_operand.vmem [shape: f32[1,128], index: 3, kind: input, shape index: {}]
  %s4 = inlined_call_operand.vmem [shape: f32[1,128], index: 4, kind: input, shape index: {}]
  %s5 = inlined_call_operand.hbm [shape: bf16[128,128], index: 5, kind: input, shape index: {}]
  %s6 = inlined_call_operand.hbm [shape: f32[4,256,128], index: 6, kind: output, shape index: {}]
  %s7 = sld [smem:[#allocation0]]
  $region85: #{tpu_custom_call.1} parent=0
    _
  %s9 = ssub.s32 1, %s7
  %s10 = scalar_select 0, %s9, %s7
  $region1: #{tpu_custom_call.1} parent=0
    #allocation6 [shape = 'u8[65536]{0}', space=vmem, size = 0x10000, scoped, tag = 'input window, operand 0']
    #allocation7 [shape = 's32[2]{0}', space=sflag, size = 0x8, scoped, tag = 'scoped memory for tpu_custom_call.1']
    #allocation8 [shape = 's32[2]{0}', space=sflag, size = 0x8, scoped, tag = 'scoped memory for tpu_custom_call.1']
    #allocation9 [shape = 'u8[32768]{0}', space=vmem, size = 0x8000, scoped, tag = 'input window, operand 1, single buffered']
    #allocation10 [shape = 's32[1]{0}', space=sflag, size = 0x4, scoped, tag = 'scoped memory for tpu_custom_call.1']
    #allocation11 [shape = 'u8[32768]{0}', space=vmem, size = 0x8000, scoped, tag = 'input window, operand 5, single buffered']
    #allocation12 [shape = 'u8[131072]{0}', space=vmem, size = 0x20000, scoped, tag = 'output window, operand 0']
    %11 = vsyncpa [#allocation7], 0
    %s12 = scalar_lea.sflag [#allocation7], 1
    %13 = vsyncpa %s12, 0
    %14 = vsyncpa [#allocation10], 0
    %15 = vsyncpa [#allocation8], 0
    %s16 = scalar_lea.sflag [#allocation8], 1
    %17 = vsyncpa %s16, 0
    loop: start=0, step=1, limit=18
    $region2: #{tpu_custom_call.1} parent=1 // loop_pre_header
      _
    $region3: #{tpu_custom_call.1} parent=1 // loop_header
      %s19 = sphi 0, %s23
      %p20 = scmp.ge.s32.totalorder %s19, 18
      %s26 = sphi 0, %s45
      %s27 = sphi 0, %s41
      %s28 = sphi 0, %s37
      %s29 = sphi 0, %s26
      %s30 = sphi 0, %s27
      %s31 = sphi 0, %s28
      %s32 = sphi 0, %s29
      %s33 = sphi 0, %s30
      %s34 = sphi 0, %s31
      %s50 = sphi 0, %s52
      %s53 = sphi 0, %s50
      %s54 = sphi 0, %s53
      %s70 = sphi 0, %s54
      %s74 = sphi 0, %s74
      %s76 = sphi 0, %s74
      %s77 = sphi 0, %s76
      %s91 = sphi 0, %s77
      %s95 = sphi 0, %s95
      %s97 = sphi 0, %s95
      %s98 = sphi 0, %s97
      %s112 = sphi 0, %s98
      %s116 = sphi 0, %s116
      %s118 = sphi 0, %s116
      %s119 = sphi 0, %s118
      %s133 = sphi 0, %s119
      %s137 = sphi 0, %s137
      %s139 = sphi 0, %s137
      %s140 = sphi 0, %s139
      %s154 = sphi 0, %s140
      %s158 = sphi 0, %s158
      %s160 = sphi 0, %s158
      %s161 = sphi 0, %s160
      %s175 = sphi 0, %s161
      %s185 = sphi 0, %s187
      %s188 = sphi 0, %s185
      %s189 = sphi 0, %s188
      %s205 = sphi 0, %s189
    $region4: #{tpu_custom_call.1} parent=1 // loop_header_branch
      %22 = sbr.rel (%p20) target = $region8
    $region5: #{tpu_custom_call.1} parent=1 // loop_body
      %s24 = ssub.s32 %s19, 1
      %s25 = ssub.s32 %s19, 2
      %s35 = sadd.s32 1, %s28
      %p36 = scmp.ge.s32.totalorder %s35, 2
      %s37 = scalar_select %p36, 0, %s35
      %s38 = sadd.s32 1, %s27
      %s39 = scalar_select %p36, %s38, %s27
      %p40 = scmp.ge.s32.totalorder %s39, 2
      %s41 = scalar_select %p40, 0, %s39
      %s42 = sadd.s32 1, %s26
      %s43 = scalar_select %p40, %s42, %s26
      %p44 = scmp.ge.s32.totalorder %s43, 4
      %s45 = scalar_select %p44, 0, %s43
      %s46 = ssub.s32 %s26, %s45
      %s47 = ssub.s32 %s28, %s37
      %s48 = sor.u32 %s46, %s47
      %p49 = scmp.eq.s32.totalorder %s48, 0
      %s51 = sadd.s32 %s50, 1
      %s52 = scalar_select %p49, %s50, %s51
      %p55 = pneg %p49
      %p56 = scmp.eq.s32.totalorder %s19, 15
      %p57 = por %p55, %p56
      %p58 = scmp.ne.s32.totalorder %s50, %s53
      %p59 = scmp.eq.s32.totalorder %s19, 0
      %p60 = por %p58, %p59
      %p61 = scmp.ne.s32.totalorder %s50, %s53
      %p62 = scmp.eq.s32.totalorder %s24, 15
      %p63 = por %p61, %p62
      %p64 = scmp.ne.s32.totalorder %s53, %s54
      %p65 = scmp.eq.s32.totalorder %s24, 0
      %p66 = por %p64, %p65
      %p67 = scmp.ne.s32.totalorder %s53, %s54
      %p68 = scmp.eq.s32.totalorder %s25, 15
      %p69 = por %p67, %p68
      %p71 = scmp.ne.s32.totalorder %s54, %s70
      %p72 = scmp.eq.s32.totalorder %s25, 0
      %p73 = por %p71, %p72
      %s75 = sadd.s32 %s74, 1
      %p78 = scmp.eq.s32.totalorder %s19, 15
      %p79 = scmp.ne.s32.totalorder %s74, %s76
      %p80 = scmp.eq.s32.totalorder %s19, 0
      %p81 = por %p79, %p80
      %p82 = scmp.ne.s32.totalorder %s74, %s76
      %p83 = scmp.eq.s32.totalorder %s24, 15
      %p84 = por %p82, %p83
      %p85 = scmp.ne.s32.totalorder %s76, %s77
      %p86 = scmp.eq.s32.totalorder %s24, 0
      %p87 = por %p85, %p86
      %p88 = scmp.ne.s32.totalorder %s76, %s77
      %p89 = scmp.eq.s32.totalorder %s25, 15
      %p90 = por %p88, %p89
      %p92 = scmp.ne.s32.totalorder %s77, %s91
      %p93 = scmp.eq.s32.totalorder %s25, 0
      %p94 = por %p92, %p93
      %s96 = sadd.s32 %s95, 1
      %p99 = scmp.eq.s32.totalorder %s19, 15
      %p100 = scmp.ne.s32.totalorder %s95, %s97
      %p101 = scmp.eq.s32.totalorder %s19, 0
      %p102 = por %p100, %p101
      %p103 = scmp.ne.s32.totalorder %s95, %s97
      %p104 = scmp.eq.s32.totalorder %s24, 15
      %p105 = por %p103, %p104
      %p106 = scmp.ne.s32.totalorder %s97, %s98
      %p107 = scmp.eq.s32.totalorder %s24, 0
      %p108 = por %p106, %p107
      %p109 = scmp.ne.s32.totalorder %s97, %s98
      %p110 = scmp.eq.s32.totalorder %s25, 15
      %p111 = por %p109, %p110
      %p113 = scmp.ne.s32.totalorder %s98, %s112
      %p114 = scmp.eq.s32.totalorder %s25, 0
      %p115 = por %p113, %p114
      %s117 = sadd.s32 %s116, 1
      %p120 = scmp.eq.s32.totalorder %s19, 15
      %p121 = scmp.ne.s32.totalorder %s116, %s118
      %p122 = scmp.eq.s32.totalorder %s19, 0
      %p123 = por %p121, %p122
      %p124 = scmp.ne.s32.totalorder %s116, %s118
      %p125 = scmp.eq.s32.totalorder %s24, 15
      %p126 = por %p124, %p125
      %p127 = scmp.ne.s32.totalorder %s118, %s119
      %p128 = scmp.eq.s32.totalorder %s24, 0
      %p129 = por %p127, %p128
      %p130 = scmp.ne.s32.totalorder %s118, %s119
      %p131 = scmp.eq.s32.totalorder %s25, 15
      %p132 = por %p130, %p131
      %p134 = scmp.ne.s32.totalorder %s119, %s133
      %p135 = scmp.eq.s32.totalorder %s25, 0
      %p136 = por %p134, %p135
      %s138 = sadd.s32 %s137, 1
      %p141 = scmp.eq.s32.totalorder %s19, 15
      %p142 = scmp.ne.s32.totalorder %s137, %s139
      %p143 = scmp.eq.s32.totalorder %s19, 0
      %p144 = por %p142, %p143
      %p145 = scmp.ne.s32.totalorder %s137, %s139
      %p146 = scmp.eq.s32.totalorder %s24, 15
      %p147 = por %p145, %p146
      %p148 = scmp.ne.s32.totalorder %s139, %s140
      %p149 = scmp.eq.s32.totalorder %s24, 0
      %p150 = por %p148, %p149
      %p151 = scmp.ne.s32.totalorder %s139, %s140
      %p152 = scmp.eq.s32.totalorder %s25, 15
      %p153 = por %p151, %p152
      %p155 = scmp.ne.s32.totalorder %s140, %s154
      %p156 = scmp.eq.s32.totalorder %s25, 0
      %p157 = por %p155, %p156
      %s159 = sadd.s32 %s158, 1
      %p162 = scmp.eq.s32.totalorder %s19, 15
      %p163 = scmp.ne.s32.totalorder %s158, %s160
      %p164 = scmp.eq.s32.totalorder %s19, 0
      %p165 = por %p163, %p164
      %p166 = scmp.ne.s32.totalorder %s158, %s160
      %p167 = scmp.eq.s32.totalorder %s24, 15
      %p168 = por %p166, %p167
      %p169 = scmp.ne.s32.totalorder %s160, %s161
      %p170 = scmp.eq.s32.totalorder %s24, 0
      %p171 = por %p169, %p170
      %p172 = scmp.ne.s32.totalorder %s160, %s161
      %p173 = scmp.eq.s32.totalorder %s25, 15
      %p174 = por %p172, %p173
      %p176 = scmp.ne.s32.totalorder %s161, %s175
      %p177 = scmp.eq.s32.totalorder %s25, 0
      %p178 = por %p176, %p177
      %s179 = smul.u32 %s28, %s27
      %s180 = smul.u32 %s37, %s41
      %s181 = ssub.s32 %s26, %s45
      %s182 = ssub.s32 %s179, %s180
      %s183 = sor.u32 %s181, %s182
      %p184 = scmp.eq.s32.totalorder %s183, 0
      %s186 = sadd.s32 %s185, 1
      %s187 = scalar_select %p184, %s185, %s186
      %p190 = pneg %p184
      %p191 = scmp.eq.s32.totalorder %s19, 15
      %p192 = por %p190, %p191
      %p193 = scmp.ne.s32.totalorder %s185, %s188
      %p194 = scmp.eq.s32.totalorder %s19, 0
      %p195 = por %p193, %p194
      %p196 = scmp.ne.s32.totalorder %s185, %s188
      %p197 = scmp.eq.s32.totalorder %s24, 15
      %p198 = por %p196, %p197
      %p199 = scmp.ne.s32.totalorder %s188, %s189
      %p200 = scmp.eq.s32.totalorder %s24, 0
      %p201 = por %p199, %p200
      %p202 = scmp.ne.s32.totalorder %s188, %s189
      %p203 = scmp.eq.s32.totalorder %s25, 15
      %p204 = por %p202, %p203
      %p206 = scmp.ne.s32.totalorder %s189, %s205
      %p207 = scmp.eq.s32.totalorder %s25, 0
      %p208 = por %p206, %p207
      %p209 = scmp.le.s32.totalorder 1, %s19
      %p210 = scmp.lt.s32.totalorder %s19, 17
      %p211 = pnand %p209, %p210
      %p212 = pneg %p211
      // Predicated region
      $region9: #{tpu_custom_call.1} parent=5 // pred_check
        _
      $region10: #{tpu_custom_call.1} parent=5 // pred_check_branch
        %214 = sbr.rel (%p211) target = $region12
      $region11: #{tpu_custom_call.1} parent=5 // pred_region
        %s215 = ssub.s32 %s19, 1
        // Predicated region
        $region13: #{tpu_custom_call.1} parent=11 // pred_check
          %p216 = pneg %p87
        $region14: #{tpu_custom_call.1} parent=11 // pred_check_branch
          %218 = sbr.rel (%p216) target = $region16
        $region15: #{tpu_custom_call.1} parent=11 // pred_region
          %s220 = ssub.s32 1024, 1024
          %221 = vsyncadd [#allocation10], %s220
          %s222 = sshll.u32 [#allocation9], 4
          %s223 = int_to_ptr.vmem [resolvable:$true] %s222
          %228 = dma.hbm_to_vmem [thread:$0]  %s1, 1024, %s223, [#allocation10], 64, 64, 4
        $region16: #{tpu_custom_call.1} parent=11 // pred_fallthru
          _
        // Predicated region
        $region17: #{tpu_custom_call.1} parent=11 // pred_check
          %p229 = pneg %p108
        $region18: #{tpu_custom_call.1} parent=11 // pred_check_branch
          %231 = sbr.rel (%p229) target = $region20
        $region19: #{tpu_custom_call.1} parent=11 // pred_region
          _
        $region20: #{tpu_custom_call.1} parent=11 // pred_fallthru
          _
        // Predicated region
        $region21: #{tpu_custom_call.1} parent=11 // pred_check
          %p232 = pneg %p129
        $region22: #{tpu_custom_call.1} parent=11 // pred_check_branch
          %234 = sbr.rel (%p232) target = $region24
        $region23: #{tpu_custom_call.1} parent=11 // pred_region
          _
        $region24: #{tpu_custom_call.1} parent=11 // pred_fallthru
          _
        // Predicated region
        $region25: #{tpu_custom_call.1} parent=11 // pred_check
          %p235 = pneg %p150
        $region26: #{tpu_custom_call.1} parent=11 // pred_check_branch
          %237 = sbr.rel (%p235) target = $region28
        $region27: #{tpu_custom_call.1} parent=11 // pred_region
          _
        $region28: #{tpu_custom_call.1} parent=11 // pred_fallthru
          _
        // Predicated region
        $region29: #{tpu_custom_call.1} parent=11 // pred_check
          %p238 = pneg %p171
        $region30: #{tpu_custom_call.1} parent=11 // pred_check_branch
          %240 = sbr.rel (%p238) target = $region32
        $region31: #{tpu_custom_call.1} parent=11 // pred_region
          %s242 = ssub.s32 1024, 1024
          %243 = vsyncadd [#allocation10], %s242
          %s244 = sshll.u32 [#allocation11], 4
          %s245 = int_to_ptr.vmem [resolvable:$true] %s244
          %250 = dma.hbm_to_vmem [thread:$0]  %s5, 1024, %s245, [#allocation10], 64, 64, 4
        $region32: #{tpu_custom_call.1} parent=11 // pred_fallthru
          _
      $region12: #{tpu_custom_call.1} parent=5 // pred_fallthru
        _
      %p251 = scmp.lt.s32.totalorder %s19, 16
      // Predicated region
      $region33: #{tpu_custom_call.1} parent=5 // pred_check
        %p252 = pneg %p251
      $region34: #{tpu_custom_call.1} parent=5 // pred_check_branch
        %254 = sbr.rel (%p252) target = $region36
      $region35: #{tpu_custom_call.1} parent=5 // pred_region
        // Predicated region
        $region37: #{tpu_custom_call.1} parent=35 // pred_check
          %p255 = pneg %p60
        $region38: #{tpu_custom_call.1} parent=35 // pred_check_branch
          %257 = sbr.rel (%p255) target = $region40
        $region39: #{tpu_custom_call.1} parent=35 // pred_region
          %s258 = sand.u32 %s50, 1
          %s259 = scalar_lea.sflag [#allocation7], %s258
          %s260 = sand.u32 %s50, 1
          %s261 = smul.addr %s260, 64
          %s262 = scalar_lea.vmem [#allocation6], %s261
          %s263 = smul.u32 16, %s28
          %s265 = ssub.s32 1024, 1024
          %266 = vsyncadd %s259, %s265
          %s267 = smul.addr %s26, 32
          %s268 = sadd.s32 %s263, %s267
          %s269 = smul.addr %s268, 64
          %s270 = scalar_lea.hbm %s0, %s269
          %s271 = sshll.u32 %s262, 4
          %s272 = int_to_ptr.vmem [resolvable:$true] %s271
          %277 = dma.hbm_to_vmem [thread:$0]  %s270, 1024, %s272, %s259, 64, 64, 4
        $region40: #{tpu_custom_call.1} parent=35 // pred_fallthru
          _
      $region36: #{tpu_custom_call.1} parent=5 // pred_fallthru
        _
      %p278 = scmp.le.s32.totalorder 1, %s19
      %p279 = scmp.lt.s32.totalorder %s19, 17
      %p280 = pnand %p278, %p279
      %p281 = pneg %p280
      // Predicated region
      $region41: #{tpu_custom_call.1} parent=5 // pred_check
        _
      $region42: #{tpu_custom_call.1} parent=5 // pred_check_branch
        %283 = sbr.rel (%p280) target = $region44
      $region43: #{tpu_custom_call.1} parent=5 // pred_region
        %s284 = ssub.s32 %s19, 1
        %s285 = sand.u32 %s53, 1
        %s286 = scalar_lea.sflag [#allocation7], %s285
        %s287 = sand.u32 %s53, 1
        %s288 = smul.addr %s287, 64
        %s289 = scalar_lea.vmem [#allocation6], %s288
        // Predicated region
        $region45: #{tpu_custom_call.1} parent=43 // pred_check
          %p290 = pneg %p66
        $region46: #{tpu_custom_call.1} parent=43 // pred_check_branch
          %292 = sbr.rel (%p290) target = $region48
        $region47: #{tpu_custom_call.1} parent=43 // pred_region
          %293 = dma.done %s286, 1024
        $region48: #{tpu_custom_call.1} parent=43 // pred_fallthru
          _
        // Predicated region
        $region49: #{tpu_custom_call.1} parent=43 // pred_check
          %p294 = pneg %p87
        $region50: #{tpu_custom_call.1} parent=43 // pred_check_branch
          %296 = sbr.rel (%p294) target = $region52
        $region51: #{tpu_custom_call.1} parent=43 // pred_region
          %297 = dma.done [#allocation10], 1024
        $region52: #{tpu_custom_call.1} parent=43 // pred_fallthru
          _
        // Predicated region
        $region53: #{tpu_custom_call.1} parent=43 // pred_check
          %p298 = pneg %p171
        $region54: #{tpu_custom_call.1} parent=43 // pred_check_branch
          %300 = sbr.rel (%p298) target = $region56
        $region55: #{tpu_custom_call.1} parent=43 // pred_region
          %301 = dma.done [#allocation10], 1024
        $region56: #{tpu_custom_call.1} parent=43 // pred_fallthru
          _
        %s302 = sand.u32 %s53, 1
        %s303 = scalar_lea.sflag [#allocation7], %s302
        %s304 = sand.u32 %s53, 1
        %s305 = smul.addr %s304, 64
        %s306 = scalar_lea.vmem [#allocation6], %s305
        %p307 = pneg %p66
        %p308 = pneg %p63
        %p309 = pneg %p87
        %p310 = pneg %p84
        %p311 = pneg %p108
        %p312 = pneg %p105
        %p313 = pneg %p129
        %p314 = pneg %p126
        %p315 = pneg %p150
        %p316 = pneg %p147
        %p317 = pneg %p171
        %p318 = pneg %p168
        %p319 = pneg %p201
        %p320 = pneg %p198
        %s321 = sand.u32 %s188, 1
        %s322 = scalar_lea.sflag [#allocation8], %s321
        %s323 = sand.u32 %s188, 1
        %s324 = smul.addr %s323, 128
        %s325 = scalar_lea.vmem [#allocation12], %s324
        %s326 = smul.u32 16, %s31
        %s327 = smul.u32 %s31, %s30
        %s328 = smul.u32 16, %s327
        %v330 = vld [vmem:[%s289] sm:$0xf]
        %v331 = vld [vmem:[%s289 + $0x4] sm:$0xf]
        %v332 = vld [vmem:[%s289 + $0x8] sm:$0xf]
        %v333 = vld [vmem:[%s289 + $0xc] sm:$0xf]
        %v334 = vld [vmem:[%s289 + $0x10] sm:$0xf]
        %v335 = vld [vmem:[%s289 + $0x14] sm:$0xf]
        %v336 = vld [vmem:[%s289 + $0x18] sm:$0xf]
        %v337 = vld [vmem:[%s289 + $0x1c] sm:$0xf]
        %v338 = vld [vmem:[%s289 + $0x20] sm:$0xf]
        %v339 = vld [vmem:[%s289 + $0x24] sm:$0xf]
        %v340 = vld [vmem:[%s289 + $0x28] sm:$0xf]
        %v341 = vld [vmem:[%s289 + $0x2c] sm:$0xf]
        %v342 = vld [vmem:[%s289 + $0x30] sm:$0xf]
        %v343 = vld [vmem:[%s289 + $0x34] sm:$0xf]
        %v344 = vld [vmem:[%s289 + $0x38] sm:$0xf]
        %v345 = vld [vmem:[%s289 + $0x3c] sm:$0xf]
        %v346 = vld [vmem:[#allocation9] sm:$0xf]
        %v347 = vld [vmem:[#allocation9 + $0x4] sm:$0xf]
        %v348 = vld [vmem:[#allocation9 + $0x8] sm:$0xf]
        %v349 = vld [vmem:[#allocation9 + $0xc] sm:$0xf]
        %v350 = vld [vmem:[#allocation9 + $0x10] sm:$0xf]
        %v351 = vld [vmem:[#allocation9 + $0x14] sm:$0xf]
        %v352 = vld [vmem:[#allocation9 + $0x18] sm:$0xf]
        %v353 = vld [vmem:[#allocation9 + $0x1c] sm:$0xf]
        %v354 = vld [vmem:[#allocation9 + $0x20] sm:$0xf]
        %v355 = vld [vmem:[#allocation9 + $0x24] sm:$0xf]
        %v356 = vld [vmem:[#allocation9 + $0x28] sm:$0xf]
        %v357 = vld [vmem:[#allocation9 + $0x2c] sm:$0xf]
        %v358 = vld [vmem:[#allocation9 + $0x30] sm:$0xf]
        %v359 = vld [vmem:[#allocation9 + $0x34] sm:$0xf]
        %v360 = vld [vmem:[#allocation9 + $0x38] sm:$0xf]
        %v361 = vld [vmem:[#allocation9 + $0x3c] sm:$0xf]
        %v362 = vld [vmem:[%s2] sm:$0x1]
        %v364 = vlaneseq
        %v365 = vshrl.u32 %v364, 7
        %v366 = vsub.s32 0, %v365
        %v367 = vrot.slane %v362, %v366
        %v385 = vunpack.c.l.b16 %v330
        %v386 = vunpack.c.l.b16 %v331
        %v387 = vunpack.c.l.b16 %v332
        %v388 = vunpack.c.l.b16 %v333
        %v389 = vunpack.c.l.b16 %v334
        %v390 = vunpack.c.l.b16 %v335
        %v391 = vunpack.c.l.b16 %v336
        %v392 = vunpack.c.l.b16 %v337
        %v393 = vunpack.c.l.b16 %v338
        %v394 = vunpack.c.l.b16 %v339
        %v395 = vunpack.c.l.b16 %v340
        %v396 = vunpack.c.l.b16 %v341
        %v397 = vunpack.c.l.b16 %v342
        %v398 = vunpack.c.l.b16 %v343
        %v399 = vunpack.c.l.b16 %v344
        %v400 = vunpack.c.l.b16 %v345
        %v401 = vpack.c.b16 %v386, %v385
        %v402 = vpack.c.b16 %v388, %v387
        %v403 = vpack.c.b16 %v390, %v389
        %v404 = vpack.c.b16 %v392, %v391
        %v405 = vpack.c.b16 %v394, %v393
        %v406 = vpack.c.b16 %v396, %v395
        %v407 = vpack.c.b16 %v398, %v397
        %v408 = vpack.c.b16 %v400, %v399
        %v433 = vunpack.c.l.b16 %v346
        %v434 = vunpack.c.l.b16 %v347
        %v435 = vunpack.c.l.b16 %v348
        %v436 = vunpack.c.l.b16 %v349
        %v437 = vunpack.c.l.b16 %v350
        %v438 = vunpack.c.l.b16 %v351
        %v439 = vunpack.c.l.b16 %v352
        %v440 = vunpack.c.l.b16 %v353
        %v441 = vunpack.c.l.b16 %v354
        %v442 = vunpack.c.l.b16 %v355
        %v443 = vunpack.c.l.b16 %v356
        %v444 = vunpack.c.l.b16 %v357
        %v445 = vunpack.c.l.b16 %v358
        %v446 = vunpack.c.l.b16 %v359
        %v447 = vunpack.c.l.b16 %v360
        %v448 = vunpack.c.l.b16 %v361
        %v449 = vpack.c.b16 %v434, %v433
        %v450 = vpack.c.b16 %v436, %v435
        %v451 = vpack.c.b16 %v438, %v437
        %v452 = vpack.c.b16 %v440, %v439
        %v453 = vpack.c.b16 %v442, %v441
        %v454 = vpack.c.b16 %v444, %v443
        %v455 = vpack.c.b16 %v446, %v445
        %v456 = vpack.c.b16 %v448, %v447
        %465 = vmatprep.subr.bf16.mxu0 0
        %466 = vmatpush1.bf16.msra.mxu0 %v456
        %467 = vmatprep.subr.bf16.mxu0 0
        %468 = vmatpush1.bf16.msra.mxu0 %v455
        %469 = vmatprep.subr.bf16.mxu0 0
        %470 = vmatpush1.bf16.msra.mxu0 %v454
        %471 = vmatprep.subr.bf16.mxu0 0
        %472 = vmatpush1.bf16.msra.mxu0 %v453
        %473 = vmatprep.subr.bf16.mxu0 0
        %474 = vmatpush1.bf16.msra.mxu0 %v452
        %475 = vmatprep.subr.bf16.mxu0 0
        %476 = vmatpush1.bf16.msra.mxu0 %v451
        %477 = vmatprep.subr.bf16.mxu0 0
        %478 = vmatpush1.bf16.msra.mxu0 %v450
        %479 = vmatprep.subr.bf16.mxu0 0
        %480 = vmatpush1.bf16.msra.mxu0 %v449
        %481 = vmatprep.subr.bf16.mxu0 0
        %482 = vmatpush2.bf16.msra.mxu0 0
        %483 = vmatprep.subr.bf16.mxu0 0
        %484 = vmatpush2.bf16.msra.mxu0 0
        %485 = vmatprep.subr.bf16.mxu0 0
        %486 = vmatpush2.bf16.msra.mxu0 0
        %487 = vmatprep.subr.bf16.mxu0 0
        %488 = vmatpush2.bf16.msra.mxu0 0
        %489 = vmatprep.subr.bf16.mxu0 0
        %490 = vmatpush2.bf16.msra.mxu0 0
        %491 = vmatprep.subr.bf16.mxu0 0
        %492 = vmatpush2.bf16.msra.mxu0 0
        %493 = vmatprep.subr.bf16.mxu0 0
        %494 = vmatpush2.bf16.msra.mxu0 0
        %495 = vmatprep.subr.bf16.mxu0 0
        %496 = vmatpush2.bf16.msra.mxu0 0
        %497 = vmatprep.mubr.bf16.mxu0 0
        %498 = vmatmul.mubr.bf16.gmra.mxu0 %v401
        %v499 = vpop.f32.mrf.mxu0
        %v500 = vadd.f32 %v367, %v499
        %v501 = vpop.f32.mrf.mxu0
        %v502 = vpop.f32.mrf.mxu0
        %v503 = vadd.f32 %v367, %v502
        %v504 = vpop.f32.mrf.mxu0
        %505 = vmatprep.mubr.bf16.mxu0 0
        %506 = vmatmul.mubr.bf16.gmra.mxu0 %v402
        %v507 = vpop.f32.mrf.mxu0
        %v508 = vadd.f32 %v367, %v507
        %v509 = vpop.f32.mrf.mxu0
        %v510 = vpop.f32.mrf.mxu0
        %v511 = vadd.f32 %v367, %v510
        %v512 = vpop.f32.mrf.mxu0
        %513 = vmatprep.mubr.bf16.mxu0 0
        %514 = vmatmul.mubr.bf16.gmra.mxu0 %v403
        %v515 = vpop.f32.mrf.mxu0
        %v516 = vadd.f32 %v367, %v515
        %v517 = vpop.f32.mrf.mxu0
        %v518 = vpop.f32.mrf.mxu0
        %v519 = vadd.f32 %v367, %v518
        %v520 = vpop.f32.mrf.mxu0
        %521 = vmatprep.mubr.bf16.mxu0 0
        %522 = vmatmul.mubr.bf16.gmra.mxu0 %v404
        %v523 = vpop.f32.mrf.mxu0
        %v524 = vadd.f32 %v367, %v523
        %v525 = vpop.f32.mrf.mxu0
        %v526 = vpop.f32.mrf.mxu0
        %v527 = vadd.f32 %v367, %v526
        %v528 = vpop.f32.mrf.mxu0
        %529 = vmatprep.mubr.bf16.mxu0 0
        %530 = vmatmul.mubr.bf16.gmra.mxu0 %v405
        %v531 = vpop.f32.mrf.mxu0
        %v532 = vadd.f32 %v367, %v531
        %v533 = vpop.f32.mrf.mxu0
        %v534 = vpop.f32.mrf.mxu0
        %v535 = vadd.f32 %v367, %v534
        %v536 = vpop.f32.mrf.mxu0
        %537 = vmatprep.mubr.bf16.mxu0 0
        %538 = vmatmul.mubr.bf16.gmra.mxu0 %v406
        %v539 = vpop.f32.mrf.mxu0
        %v540 = vadd.f32 %v367, %v539
        %v541 = vpop.f32.mrf.mxu0
        %v542 = vpop.f32.mrf.mxu0
        %v543 = vadd.f32 %v367, %v542
        %v544 = vpop.f32.mrf.mxu0
        %545 = vmatprep.mubr.bf16.mxu0 0
        %546 = vmatmul.mubr.bf16.gmra.mxu0 %v407
        %v547 = vpop.f32.mrf.mxu0
        %v548 = vadd.f32 %v367, %v547
        %v549 = vpop.f32.mrf.mxu0
        %v550 = vpop.f32.mrf.mxu0
        %v551 = vadd.f32 %v367, %v550
        %v552 = vpop.f32.mrf.mxu0
        %553 = vmatprep.mubr.bf16.mxu0 0
        %554 = vmatmul.mubr.bf16.gmra.mxu0 %v408
        %v555 = vpop.f32.mrf.mxu0
        %v556 = vadd.f32 %v367, %v555
        %v557 = vpop.f32.mrf.mxu0
        %v558 = vpop.f32.mrf.mxu0
        %v559 = vadd.f32 %v367, %v558
        %v560 = vpop.f32.mrf.mxu0
        %561 = vdwg.mxu0
        %p562 = scmp.eq.s32.totalorder %s30, 0
        %p563 = scmp.eq.s32.totalorder %s31, 0
        %p564 = pnand %p562, %p563
        %p565 = pneg %p564
        // Predicated region
        $region57: #{tpu_custom_call.1} parent=43 // pred_check
          _
        $region58: #{tpu_custom_call.1} parent=43 // pred_check_branch
          %567 = sbr.rel (%p564) target = $region60
        $region59: #{tpu_custom_call.1} parent=43 // pred_region
          %568 = vst [vmem:[#allocation2] sm:$0x1] 0.0
          %569 = vst [vmem:[#allocation3] sm:$0x1] 0.0
        $region60: #{tpu_custom_call.1} parent=43 // pred_fallthru
          _
        // Predicated region
        $region61: #{tpu_custom_call.1} parent=43 // pred_check
          %p570 = pneg %p562
        $region62: #{tpu_custom_call.1} parent=43 // pred_check_branch
          %572 = sbr.rel (%p570) target = $region64
        $region63: #{tpu_custom_call.1} parent=43 // pred_region
          %v573 = vlaneseq
          %v574 = vshrl.u32 %v573, 7
          %v575 = vadd.s32 %v574, 8
          %v576 = vadd.s32 %v574, 16
          %v577 = vadd.s32 %v574, 24
          %v578 = vadd.s32 %v574, 32
          %v579 = vadd.s32 %v574, 40
          %v580 = vadd.s32 %v574, 48
          %v581 = vadd.s32 %v574, 56
          %v582 = vadd.s32 %v574, 64
          %v583 = vadd.s32 %v574, 72
          %v584 = vadd.s32 %v574, 80
          %v585 = vadd.s32 %v574, 88
          %v586 = vadd.s32 %v574, 96
          %v587 = vadd.s32 %v574, 104
          %v588 = vadd.s32 %v574, 112
          %v589 = vadd.s32 %v574, 120
          %s590 = smul.u32 %s31, 128
          %v591 = vstv %s590
          %v592 = vadd.s32 %v574, %v591
          %v593 = vadd.s32 %v575, %v591
          %v594 = vadd.s32 %v576, %v591
          %v595 = vadd.s32 %v577, %v591
          %v596 = vadd.s32 %v578, %v591
          %v597 = vadd.s32 %v579, %v591
          %v598 = vadd.s32 %v580, %v591
          %v599 = vadd.s32 %v581, %v591
          %v600 = vadd.s32 %v582, %v591
          %v601 = vadd.s32 %v583, %v591
          %v602 = vadd.s32 %v584, %v591
          %v603 = vadd.s32 %v585, %v591
          %v604 = vadd.s32 %v586, %v591
          %v605 = vadd.s32 %v587, %v591
          %v606 = vadd.s32 %v588, %v591
          %v607 = vadd.s32 %v589, %v591
          %vm608 = vcmp.lt.s32.totalorder %v592, 256
          %vm609 = vcmp.lt.s32.totalorder %v593, 256
          %vm610 = vcmp.lt.s32.totalorder %v594, 256
          %vm611 = vcmp.lt.s32.totalorder %v595, 256
          %vm612 = vcmp.lt.s32.totalorder %v596, 256
          %vm613 = vcmp.lt.s32.totalorder %v597, 256
          %vm614 = vcmp.lt.s32.totalorder %v598, 256
          %vm615 = vcmp.lt.s32.totalorder %v599, 256
          %vm616 = vcmp.lt.s32.totalorder %v600, 256
          %vm617 = vcmp.lt.s32.totalorder %v601, 256
          %vm618 = vcmp.lt.s32.totalorder %v602, 256
          %vm619 = vcmp.lt.s32.totalorder %v603, 256
          %vm620 = vcmp.lt.s32.totalorder %v604, 256
          %vm621 = vcmp.lt.s32.totalorder %v605, 256
          %vm622 = vcmp.lt.s32.totalorder %v606, 256
          %vm623 = vcmp.lt.s32.totalorder %v607, 256
          %v624 = vsel %vm608, 1, 0
          %v625 = vsel %vm609, 1, 0
          %v626 = vsel %vm610, 1, 0
          %v627 = vsel %vm611, 1, 0
          %v628 = vsel %vm612, 1, 0
          %v629 = vsel %vm613, 1, 0
          %v630 = vsel %vm614, 1, 0
          %v631 = vsel %vm615, 1, 0
          %v632 = vsel %vm616, 1, 0
          %v633 = vsel %vm617, 1, 0
          %v634 = vsel %vm618, 1, 0
          %v635 = vsel %vm619, 1, 0
          %v636 = vsel %vm620, 1, 0
          %v637 = vsel %vm621, 1, 0
          %v638 = vsel %vm622, 1, 0
          %v639 = vsel %vm623, 1, 0
          %v640 = vcvt.s32.f32 %v624
          %v641 = vcvt.s32.f32 %v625
          %v642 = vcvt.s32.f32 %v626
          %v643 = vcvt.s32.f32 %v627
          %v644 = vcvt.s32.f32 %v628
          %v645 = vcvt.s32.f32 %v629
          %v646 = vcvt.s32.f32 %v630
          %v647 = vcvt.s32.f32 %v631
          %v648 = vcvt.s32.f32 %v632
          %v649 = vcvt.s32.f32 %v633
          %v650 = vcvt.s32.f32 %v634
          %v651 = vcvt.s32.f32 %v635
          %v652 = vcvt.s32.f32 %v636
          %v653 = vcvt.s32.f32 %v637
          %v654 = vcvt.s32.f32 %v638
          %v655 = vcvt.s32.f32 %v639
          %v656 = vmul.f32 %v500, %v640
          %v657 = vmul.f32 %v503, %v641
          %v658 = vmul.f32 %v508, %v642
          %v659 = vmul.f32 %v511, %v643
          %v660 = vmul.f32 %v516, %v644
          %v661 = vmul.f32 %v519, %v645
          %v662 = vmul.f32 %v524, %v646
          %v663 = vmul.f32 %v527, %v647
          %v664 = vmul.f32 %v532, %v648
          %v665 = vmul.f32 %v535, %v649
          %v666 = vmul.f32 %v540, %v650
          %v667 = vmul.f32 %v543, %v651
          %v668 = vmul.f32 %v548, %v652
          %v669 = vmul.f32 %v551, %v653
          %v670 = vmul.f32 %v556, %v654
          %v671 = vmul.f32 %v559, %v655
          %v672 = vld [vmem:[#allocation2] sm:$0x1]
          %v673 = vadd.f32 %v656, %v657
          %v674 = vadd.f32 %v673, %v658
          %v675 = vadd.f32 %v674, %v659
          %v676 = vadd.f32 %v675, %v660
          %v677 = vadd.f32 %v676, %v661
          %v678 = vadd.f32 %v677, %v662
          %v679 = vadd.f32 %v678, %v663
          %v680 = vadd.f32 %v679, %v664
          %v681 = vadd.f32 %v680, %v665
          %v682 = vadd.f32 %v681, %v666
          %v683 = vadd.f32 %v682, %v667
          %v684 = vadd.f32 %v683, %v668
          %v685 = vadd.f32 %v684, %v669
          %v686 = vadd.f32 %v685, %v670
          %v687 = vadd.f32 %v686, %v671
          %v688 = vrot.slane %v687, 4
          %v689 = vadd.f32 %v687, %v688
          %v690 = vrot.slane %v689, 2
          %v691 = vadd.f32 %v689, %v690
          %v692 = vrot.slane %v691, 1
          %v693 = vadd.f32 %v691, %v692
          %v694 = vadd.f32 %v672, %v693
          %695 = vst [vmem:[#allocation2] sm:$0x1] %v694
          %v696 = vld [vmem:[#allocation3] sm:$0x1]
          %v697 = vmul.f32 %v656, %v500
          %v698 = vmul.f32 %v657, %v503
          %v699 = vmul.f32 %v658, %v508
          %v700 = vmul.f32 %v659, %v511
          %v701 = vmul.f32 %v660, %v516
          %v702 = vmul.f32 %v661, %v519
          %v703 = vmul.f32 %v662, %v524
          %v704 = vmul.f32 %v663, %v527
          %v705 = vmul.f32 %v664, %v532
          %v706 = vmul.f32 %v665, %v535
          %v707 = vmul.f32 %v666, %v540
          %v708 = vmul.f32 %v667, %v543
          %v709 = vmul.f32 %v668, %v548
          %v710 = vmul.f32 %v669, %v551
          %v711 = vmul.f32 %v670, %v556
          %v712 = vmul.f32 %v671, %v559
          %v713 = vadd.f32 %v697, %v698
          %v714 = vadd.f32 %v713, %v699
          %v715 = vadd.f32 %v714, %v700
          %v716 = vadd.f32 %v715, %v701
          %v717 = vadd.f32 %v716, %v702
          %v718 = vadd.f32 %v717, %v703
          %v719 = vadd.f32 %v718, %v704
          %v720 = vadd.f32 %v719, %v705
          %v721 = vadd.f32 %v720, %v706
          %v722 = vadd.f32 %v721, %v707
          %v723 = vadd.f32 %v722, %v708
          %v724 = vadd.f32 %v723, %v709
          %v725 = vadd.f32 %v724, %v710
          %v726 = vadd.f32 %v725, %v711
          %v727 = vadd.f32 %v726, %v712
          %v728 = vrot.slane %v727, 4
          %v729 = vadd.f32 %v727, %v728
          %v730 = vrot.slane %v729, 2
          %v731 = vadd.f32 %v729, %v730
          %v732 = vrot.slane %v731, 1
          %v733 = vadd.f32 %v731, %v732
          %v734 = vadd.f32 %v696, %v733
          %735 = vst [vmem:[#allocation3] sm:$0x1] %v734
        $region64: #{tpu_custom_call.1} parent=43 // pred_fallthru
          _
        %p736 = scmp.eq.s32.totalorder %s30, 1
        %p737 = pnand %p736, %p563
        %p738 = pneg %p737
        // Predicated region
        $region65: #{tpu_custom_call.1} parent=43 // pred_check
          _
        $region66: #{tpu_custom_call.1} parent=43 // pred_check_branch
          %740 = sbr.rel (%p737) target = $region68
        $region67: #{tpu_custom_call.1} parent=43 // pred_region
          %v741 = vld [vmem:[#allocation11] sm:$0xf]
          %v742 = vld [vmem:[#allocation11 + $0x4] sm:$0xf]
          %v743 = vld [vmem:[#allocation11 + $0x8] sm:$0xf]
          %v744 = vld [vmem:[#allocation11 + $0xc] sm:$0xf]
          %v745 = vld [vmem:[#allocation11 + $0x10] sm:$0xf]
          %v746 = vld [vmem:[#allocation11 + $0x14] sm:$0xf]
          %v747 = vld [vmem:[#allocation11 + $0x18] sm:$0xf]
          %v748 = vld [vmem:[#allocation11 + $0x1c] sm:$0xf]
          %v749 = vld [vmem:[#allocation11 + $0x20] sm:$0xf]
          %v750 = vld [vmem:[#allocation11 + $0x24] sm:$0xf]
          %v751 = vld [vmem:[#allocation11 + $0x28] sm:$0xf]
          %v752 = vld [vmem:[#allocation11 + $0x2c] sm:$0xf]
          %v753 = vld [vmem:[#allocation11 + $0x30] sm:$0xf]
          %v754 = vld [vmem:[#allocation11 + $0x34] sm:$0xf]
          %v755 = vld [vmem:[#allocation11 + $0x38] sm:$0xf]
          %v756 = vld [vmem:[#allocation11 + $0x3c] sm:$0xf]
          %v757 = vunpack.c.l.bf16 %v741
          %v758 = vunpack.c.l.bf16 %v742
          %v759 = vunpack.c.l.bf16 %v743
          %v760 = vunpack.c.l.bf16 %v744
          %v761 = vunpack.c.l.bf16 %v745
          %v762 = vunpack.c.l.bf16 %v746
          %v763 = vunpack.c.l.bf16 %v747
          %v764 = vunpack.c.l.bf16 %v748
          %v765 = vunpack.c.l.bf16 %v749
          %v766 = vunpack.c.l.bf16 %v750
          %v767 = vunpack.c.l.bf16 %v751
          %v768 = vunpack.c.l.bf16 %v752
          %v769 = vunpack.c.l.bf16 %v753
          %v770 = vunpack.c.l.bf16 %v754
          %v771 = vunpack.c.l.bf16 %v755
          %v772 = vunpack.c.l.bf16 %v756
          %v773 = vld [vmem:[#allocation2] sm:$0x1]
          %774 = vmatprep.subr.mxu0 0.0
          %775 = vmatpush1.msra.mxu0 %v772
          %776 = vmatprep.subr.mxu0 0.0
          %777 = vmatpush1.msra.mxu0 %v771
          %778 = vmatprep.subr.mxu0 0.0
          %779 = vmatpush1.msra.mxu0 %v770
          %780 = vmatprep.subr.mxu0 0.0
          %781 = vmatpush1.msra.mxu0 %v769
          %782 = vmatprep.subr.mxu0 0.0
          %783 = vmatpush1.msra.mxu0 %v768
          %784 = vmatprep.subr.mxu0 0.0
          %785 = vmatpush1.msra.mxu0 %v767
          %786 = vmatprep.subr.mxu0 0.0
          %787 = vmatpush1.msra.mxu0 %v766
          %788 = vmatprep.subr.mxu0 0.0
          %789 = vmatpush1.msra.mxu0 %v765
          %790 = vmatprep.subr.mxu0 0.0
          %791 = vmatpush1.msra.mxu0 %v764
          %792 = vmatprep.subr.mxu0 0.0
          %793 = vmatpush1.msra.mxu0 %v763
          %794 = vmatprep.subr.mxu0 0.0
          %795 = vmatpush1.msra.mxu0 %v762
          %796 = vmatprep.subr.mxu0 0.0
          %797 = vmatpush1.msra.mxu0 %v761
          %798 = vmatprep.subr.mxu0 0.0
          %799 = vmatpush1.msra.mxu0 %v760
          %800 = vmatprep.subr.mxu0 0.0
          %801 = vmatpush1.msra.mxu0 %v759
          %802 = vmatprep.subr.mxu0 0.0
          %803 = vmatpush1.msra.mxu0 %v758
          %804 = vmatprep.subr.mxu0 0.0
          %805 = vmatpush1.msra.mxu0 %v757
          %806 = vmatprep.subr.mxu0 0.0
          %807 = vmatpush2.msra.mxu0 0.0
          %808 = vmatprep.subr.mxu0 0.0
          %809 = vmatpush2.msra.mxu0 0.0
          %810 = vmatprep.subr.mxu0 0.0
          %811 = vmatpush2.msra.mxu0 0.0
          %812 = vmatprep.subr.mxu0 0.0
          %813 = vmatpush2.msra.mxu0 0.0
          %814 = vmatprep.subr.mxu0 0.0
          %815 = vmatpush2.msra.mxu0 0.0
          %816 = vmatprep.subr.mxu0 0.0
          %817 = vmatpush2.msra.mxu0 0.0
          %818 = vmatprep.subr.mxu0 0.0
          %819 = vmatpush2.msra.mxu0 0.0
          %820 = vmatprep.subr.mxu0 0.0
          %821 = vmatpush2.msra.mxu0 0.0
          %822 = vmatprep.subr.mxu0 0.0
          %823 = vmatpush2.msra.mxu0 0.0
          %824 = vmatprep.subr.mxu0 0.0
          %825 = vmatpush2.msra.mxu0 0.0
          %826 = vmatprep.subr.mxu0 0.0
          %827 = vmatpush2.msra.mxu0 0.0
          %828 = vmatprep.subr.mxu0 0.0
          %829 = vmatpush2.msra.mxu0 0.0
          %830 = vmatprep.subr.mxu0 0.0
          %831 = vmatpush2.msra.mxu0 0.0
          %832 = vmatprep.subr.mxu0 0.0
          %833 = vmatpush2.msra.mxu0 0.0
          %834 = vmatprep.subr.mxu0 0.0
          %835 = vmatpush2.msra.mxu0 0.0
          %836 = vmatprep.subr.mxu0 0.0
          %837 = vmatpush2.msra.mxu0 0.0
          %838 = vmatprep.mubr.f32.mxu0 0.0
          %839 = vmatmul.mubr.f32.gmra.mxu0 %v773
          %v840 = vpop.f32.mrf.mxu0
          %v841 = vadd.f32 0.0, %v840
          %v842 = vpop.f32.mrf.mxu0
          %843 = vdwg.mxu0
          %v844 = vld [vmem:[#allocation3] sm:$0x1]
          %845 = vmatprep.subr.mxu0 0.0
          %846 = vmatpush1.msra.mxu0 %v772
          %847 = vmatprep.subr.mxu0 0.0
          %848 = vmatpush1.msra.mxu0 %v771
          %849 = vmatprep.subr.mxu0 0.0
          %850 = vmatpush1.msra.mxu0 %v770
          %851 = vmatprep.subr.mxu0 0.0
          %852 = vmatpush1.msra.mxu0 %v769
          %853 = vmatprep.subr.mxu0 0.0
          %854 = vmatpush1.msra.mxu0 %v768
          %855 = vmatprep.subr.mxu0 0.0
          %856 = vmatpush1.msra.mxu0 %v767
          %857 = vmatprep.subr.mxu0 0.0
          %858 = vmatpush1.msra.mxu0 %v766
          %859 = vmatprep.subr.mxu0 0.0
          %860 = vmatpush1.msra.mxu0 %v765
          %861 = vmatprep.subr.mxu0 0.0
          %862 = vmatpush1.msra.mxu0 %v764
          %863 = vmatprep.subr.mxu0 0.0
          %864 = vmatpush1.msra.mxu0 %v763
          %865 = vmatprep.subr.mxu0 0.0
          %866 = vmatpush1.msra.mxu0 %v762
          %867 = vmatprep.subr.mxu0 0.0
          %868 = vmatpush1.msra.mxu0 %v761
          %869 = vmatprep.subr.mxu0 0.0
          %870 = vmatpush1.msra.mxu0 %v760
          %871 = vmatprep.subr.mxu0 0.0
          %872 = vmatpush1.msra.mxu0 %v759
          %873 = vmatprep.subr.mxu0 0.0
          %874 = vmatpush1.msra.mxu0 %v758
          %875 = vmatprep.subr.mxu0 0.0
          %876 = vmatpush1.msra.mxu0 %v757
          %877 = vmatprep.subr.mxu0 0.0
          %878 = vmatpush2.msra.mxu0 0.0
          %879 = vmatprep.subr.mxu0 0.0
          %880 = vmatpush2.msra.mxu0 0.0
          %881 = vmatprep.subr.mxu0 0.0
          %882 = vmatpush2.msra.mxu0 0.0
          %883 = vmatprep.subr.mxu0 0.0
          %884 = vmatpush2.msra.mxu0 0.0
          %885 = vmatprep.subr.mxu0 0.0
          %886 = vmatpush2.msra.mxu0 0.0
          %887 = vmatprep.subr.mxu0 0.0
          %888 = vmatpush2.msra.mxu0 0.0
          %889 = vmatprep.subr.mxu0 0.0
          %890 = vmatpush2.msra.mxu0 0.0
          %891 = vmatprep.subr.mxu0 0.0
          %892 = vmatpush2.msra.mxu0 0.0
          %893 = vmatprep.subr.mxu0 0.0
          %894 = vmatpush2.msra.mxu0 0.0
          %895 = vmatprep.subr.mxu0 0.0
          %896 = vmatpush2.msra.mxu0 0.0
          %897 = vmatprep.subr.mxu0 0.0
          %898 = vmatpush2.msra.mxu0 0.0
          %899 = vmatprep.subr.mxu0 0.0
          %900 = vmatpush2.msra.mxu0 0.0
          %901 = vmatprep.subr.mxu0 0.0
          %902 = vmatpush2.msra.mxu0 0.0
          %903 = vmatprep.subr.mxu0 0.0
          %904 = vmatpush2.msra.mxu0 0.0
          %905 = vmatprep.subr.mxu0 0.0
          %906 = vmatpush2.msra.mxu0 0.0
          %907 = vmatprep.subr.mxu0 0.0
          %908 = vmatpush2.msra.mxu0 0.0
          %909 = vmatprep.mubr.f32.mxu0 0.0
          %910 = vmatmul.mubr.f32.gmra.mxu0 %v844
          %v911 = vpop.f32.mrf.mxu0
          %v912 = vadd.f32 0.0, %v911
          %v913 = vpop.f32.mrf.mxu0
          %914 = vdwg.mxu0
          %v915 = vmul.f32 %v841, 0.00390625
          %v916 = vmul.f32 %v912, 0.00390625
          %v917 = vmul.f32 %v915, %v915
          %v918 = vsub.f32 %v916, %v917
          %v919 = vmax.f32 %v918, 0.0
          %920 = vst [vmem:[#allocation4] sm:$0x1] %v915
          %v921 = vadd.f32 %v919, 1e-05
          %v922 = vrsqrt.pop %v921
          %v923 = vld [vmem:[%s3] sm:$0x1]
          %v924 = vmul.f32 %v922, %v923
          %925 = vst [vmem:[#allocation5] sm:$0x1] %v924
        $region68: #{tpu_custom_call.1} parent=43 // pred_fallthru
          _
        // Predicated region
        $region69: #{tpu_custom_call.1} parent=43 // pred_check
          %p926 = pneg %p736
        $region70: #{tpu_custom_call.1} parent=43 // pred_check_branch
          %928 = sbr.rel (%p926) target = $region72
        $region71: #{tpu_custom_call.1} parent=43 // pred_region
          %v929 = vld [vmem:[#allocation4] sm:$0x1]
          %v931 = vlaneseq
          %v932 = vshrl.u32 %v931, 7
          %v933 = vsub.s32 0, %v932
          %v934 = vrot.slane %v929, %v933
          %v936 = vsub.f32 %v500, %v934
          %v937 = vsub.f32 %v503, %v934
          %v938 = vsub.f32 %v508, %v934
          %v939 = vsub.f32 %v511, %v934
          %v940 = vsub.f32 %v516, %v934
          %v941 = vsub.f32 %v519, %v934
          %v942 = vsub.f32 %v524, %v934
          %v943 = vsub.f32 %v527, %v934
          %v944 = vsub.f32 %v532, %v934
          %v945 = vsub.f32 %v535, %v934
          %v946 = vsub.f32 %v540, %v934
          %v947 = vsub.f32 %v543, %v934
          %v948 = vsub.f32 %v548, %v934
          %v949 = vsub.f32 %v551, %v934
          %v950 = vsub.f32 %v556, %v934
          %v951 = vsub.f32 %v559, %v934
          %v952 = vld [vmem:[#allocation5] sm:$0x1]
          %v954 = vlaneseq
          %v955 = vshrl.u32 %v954, 7
          %v956 = vsub.s32 0, %v955
          %v957 = vrot.slane %v952, %v956
          %v959 = vmul.f32 %v936, %v957
          %v960 = vmul.f32 %v937, %v957
          %v961 = vmul.f32 %v938, %v957
          %v962 = vmul.f32 %v939, %v957
          %v963 = vmul.f32 %v940, %v957
          %v964 = vmul.f32 %v941, %v957
          %v965 = vmul.f32 %v942, %v957
          %v966 = vmul.f32 %v943, %v957
          %v967 = vmul.f32 %v944, %v957
          %v968 = vmul.f32 %v945, %v957
          %v969 = vmul.f32 %v946, %v957
          %v970 = vmul.f32 %v947, %v957
          %v971 = vmul.f32 %v948, %v957
          %v972 = vmul.f32 %v949, %v957
          %v973 = vmul.f32 %v950, %v957
          %v974 = vmul.f32 %v951, %v957
          %v975 = vld [vmem:[%s4] sm:$0x1]
          %v977 = vlaneseq
          %v978 = vshrl.u32 %v977, 7
          %v979 = vsub.s32 0, %v978
          %v980 = vrot.slane %v975, %v979
          %v982 = vadd.f32 %v959, %v980
          %v983 = vadd.f32 %v960, %v980
          %v984 = vadd.f32 %v961, %v980
          %v985 = vadd.f32 %v962, %v980
          %v986 = vadd.f32 %v963, %v980
          %v987 = vadd.f32 %v964, %v980
          %v988 = vadd.f32 %v965, %v980
          %v989 = vadd.f32 %v966, %v980
          %v990 = vadd.f32 %v967, %v980
          %v991 = vadd.f32 %v968, %v980
          %v992 = vadd.f32 %v969, %v980
          %v993 = vadd.f32 %v970, %v980
          %v994 = vadd.f32 %v971, %v980
          %v995 = vadd.f32 %v972, %v980
          %v996 = vadd.f32 %v973, %v980
          %v997 = vadd.f32 %v974, %v980
          %998 = vst [vmem:[%s325] sm:$0xff] %v982
          %999 = vst [vmem:[%s325 + $0x8] sm:$0xff] %v983
          %1000 = vst [vmem:[%s325 + $0x10] sm:$0xff] %v984
          %1001 = vst [vmem:[%s325 + $0x18] sm:$0xff] %v985
          %1002 = vst [vmem:[%s325 + $0x20] sm:$0xff] %v986
          %1003 = vst [vmem:[%s325 + $0x28] sm:$0xff] %v987
          %1004 = vst [vmem:[%s325 + $0x30] sm:$0xff] %v988
          %1005 = vst [vmem:[%s325 + $0x38] sm:$0xff] %v989
          %1006 = vst [vmem:[%s325 + $0x40] sm:$0xff] %v990
          %1007 = vst [vmem:[%s325 + $0x48] sm:$0xff] %v991
          %1008 = vst [vmem:[%s325 + $0x50] sm:$0xff] %v992
          %1009 = vst [vmem:[%s325 + $0x58] sm:$0xff] %v993
          %1010 = vst [vmem:[%s325 + $0x60] sm:$0xff] %v994
          %1011 = vst [vmem:[%s325 + $0x68] sm:$0xff] %v995
          %1012 = vst [vmem:[%s325 + $0x70] sm:$0xff] %v996
          %1013 = vst [vmem:[%s325 + $0x78] sm:$0xff] %v997
        $region72: #{tpu_custom_call.1} parent=43 // pred_fallthru
          _
        %s1014 = sand.u32 %s188, 1
        %s1015 = scalar_lea.sflag [#allocation8], %s1014
        %s1016 = sand.u32 %s188, 1
        %s1017 = smul.addr %s1016, 128
        %s1018 = scalar_lea.vmem [#allocation12], %s1017
        // Predicated region
        $region73: #{tpu_custom_call.1} parent=43 // pred_check
          %p1019 = pneg %p198
        $region74: #{tpu_custom_call.1} parent=43 // pred_check_branch
          %1021 = sbr.rel (%p1019) target = $region76
        $region75: #{tpu_custom_call.1} parent=43 // pred_region
          %s1022 = smul.u32 %s31, %s30
          %s1023 = smul.u32 16, %s1022
          %s1025 = ssub.s32 2048, 2048
          %1026 = vsyncadd %s1015, %s1025
          %s1027 = smul.addr %s29, 32
          %s1028 = sadd.s32 %s1023, %s1027
          %s1029 = smul.addr %s1028, 128
          %s1030 = scalar_lea.hbm %s6, %s1029
          %s1031 = sshll.u32 %s1018, 4
          %s1032 = int_to_ptr.vmem [resolvable:$true] %s1031
          %1037 = dma.vmem_to_hbm [thread:$0]  %s1032, 2048, %s1030, %s1015, 128, 128, 8
        $region76: #{tpu_custom_call.1} parent=43 // pred_fallthru
          _
      $region44: #{tpu_custom_call.1} parent=5 // pred_fallthru
        _
      %p1038 = scmp.le.s32.totalorder 2, %s19
      // Predicated region
      $region77: #{tpu_custom_call.1} parent=5 // pred_check
        %p1039 = pneg %p1038
      $region78: #{tpu_custom_call.1} parent=5 // pred_check_branch
        %1041 = sbr.rel (%p1039) target = $region80
      $region79: #{tpu_custom_call.1} parent=5 // pred_region
        %s1042 = ssub.s32 %s19, 2
        // Predicated region
        $region81: #{tpu_custom_call.1} parent=79 // pred_check
          %p1043 = pneg %p204
        $region82: #{tpu_custom_call.1} parent=79 // pred_check_branch
          %1045 = sbr.rel (%p1043) target = $region84
        $region83: #{tpu_custom_call.1} parent=79 // pred_region
          %s1046 = sand.u32 %s189, 1
          %s1047 = scalar_lea.sflag [#allocation8], %s1046
          %s1048 = sand.u32 %s189, 1
          %s1049 = smul.addr %s1048, 128
          %s1050 = scalar_lea.vmem [#allocation12], %s1049
          %1051 = dma.done %s1047, 2048
        $region84: #{tpu_custom_call.1} parent=79 // pred_fallthru
          _
      $region80: #{tpu_custom_call.1} parent=5 // pred_fallthru
        _
    $region6: #{tpu_custom_call.1} parent=1 // loop_footer
      %s23 = sadd.s32 1, %s19
    $region7: #{tpu_custom_call.1} parent=1 // loop_footer_branch
      %18 = sbr.rel target = $region3
    $region8: #{tpu_custom_call.1} parent=1 // loop_exit
      _
    %1052 = vsyncpa [#allocation7], 1
    %s1053 = scalar_lea.sflag [#allocation7], 1
    %1054 = vsyncpa %s1053, 1
    %1055 = vsyncpa [#allocation10], 1
    %1056 = vsyncpa [#allocation8], 1
    %s1057 = scalar_lea.sflag [#allocation8], 1
    %1058 = vsyncpa %s1057, 1

</llo_original>
